<compile_context>
chip_gen: v6e
topology: v6e:2x2x1
jax: 0.10.0
libtpu: 0.0.40
codegen_flags: <defaults>
</compile_context>

<pallas_src>
import jax
import jax.numpy as jnp
from jax import lax
from jax.experimental import pallas as pl
from jax.experimental.pallas import tpu as pltpu


def _round_up(v, m):
    return (v + m - 1) // m * m


def _pick_vmem_limit():
    """Per-generation scoped-VMEM budget: ~half of physical VMEM, capped.
    v5e/v6e (128 MiB physical) -> 64 MiB, v7x (64 MiB physical) -> 32 MiB, fallback 48 MiB."""
    try:
        cap = int(pltpu.get_tpu_info().vmem_capacity_bytes)
        return int(min(max(cap // 2, 32 * 1024 * 1024), 100 * 1024 * 1024))
    except Exception:
        return 48 * 1024 * 1024


_VMEM_LIMIT = _pick_vmem_limit()
# Bigger row tiles amortize the ~0.35 us per-grid-step overhead on 128-MiB-VMEM parts; keep them
# smaller where the scoped budget is tight (v7x).
_ROW_TILE_CAP = 1024 if _VMEM_LIMIT >= 64 * 1024 * 1024 else 512


# ----------------------------- Pallas kernels -----------------------------

def _aerial_kernel(x_ref, idx_ref, w_ref, b_ref, o_ref):
    # x_ref: (1, N, D) f32, idx_ref: (1, 1, N) i32 (N on the lane axis -> dense load),
    # w_ref: (D, C) f32, b_ref: (1, C) f32, o_ref: (1, C, hw_tile) f32 (channels-first, spatial
    # axis on lanes -> dense stores and a free NCHW reshape outside).
    n = x_ref.shape[1]
    hw_tile = o_ref.shape[2]
    # per-token head on the MXU (f32 operands -> bf16 MXU passes with f32 accumulation on HW)
    tok = jnp.dot(x_ref[0], w_ref[...], preferred_element_type=jnp.float32) + b_ref[...]  # (N, C)
    # TODO(synk): hoist `tok` into a VMEM scratch (pl.when on the hw axis) once H*W tile counts
    # grow large; for now it is recomputed per hw tile (cheap relative to the scatter matmul).
    # token -> flat-grid unpooling as a one-hot matmul over this hw tile only:
    # scat[p, n] = (indices[n] == hw_base + p).  Grid positions with no token come out exactly 0
    # (matches zero-init scatter); duplicate indices would accumulate (assumed unique per row).
    hw_base = pl.program_id(1) * hw_tile
    pos = lax.broadcasted_iota(jnp.int32, (hw_tile, n), 0) + hw_base
    scat = (pos == idx_ref[0]).astype(jnp.float32)                    # (hw_tile, N)
    # contract over N without materializing tok.T (no XLU transpose on the MXU critical path)
    o_ref[0] = lax.dot_general(tok, scat, (((0,), (1,)), ((), ())),
                               preferred_element_type=jnp.float32
                               ).astype(o_ref.dtype)                  # (C, hw_tile)


def _mlp_kernel(x_ref, w1_ref, b1_ref, w2_ref, b2_ref, o_ref):
    # f32 operands (default-precision matmul = bf16 MXU passes, f32 accumulation on TPU);
    # bias adds + GELU stay in f32 (VPU/EUP).  w2/b2 are column-padded to a 128 multiple so the
    # final store is an unmasked, lane-dense vst.
    h = jnp.dot(x_ref[...], w1_ref[...], preferred_element_type=jnp.float32) + b1_ref[...]
    # tanh-approx GELU keeps the transcendental on the EUP.
    # TODO(synk): PyTorch nn.GELU defaults to the exact erf form; switch if the reference
    # projector requires erf GELU.
    h = jax.nn.gelu(h, approximate=True)
    y = jnp.dot(h, w2_ref[...], preferred_element_type=jnp.float32) + b2_ref[...]
    o_ref[...] = y.astype(o_ref.dtype)


def _linear_kernel(x_ref, w_ref, b_ref, o_ref):
    # tiny single linear layer (used for the hoisted time-series date head)
    o_ref[...] = (jnp.dot(x_ref[...], w_ref[...], preferred_element_type=jnp.float32)
                  + b_ref[...]).astype(o_ref.dtype)


def _ts_fused_kernel(x_ref, att_ref, dc_ref, wx_ref, bx_ref, o_ref):
    # Fused token head + attention combine for one (batch, token-tile) block.
    # x_ref (1, tile_n, D), att_ref (1, T, tile_n), dc_ref (1, T, C) (precomputed date head),
    # wx (D, C), bx (1, C), o_ref (1, T, tile_n*C): the (N, C) pair is stored as a row-major
    # flatten so every store is lane-dense and the wrapper reshape back to (B, T, N, C) is free.
    t = att_ref.shape[1]
    tile_n = x_ref.shape[1]
    c = wx_ref.shape[1]
    xc = jnp.dot(x_ref[0], wx_ref[...], preferred_element_type=jnp.float32) + bx_ref[...]  # (tile_n, C)
    out = att_ref[0][:, :, None] * xc[None, :, :] + dc_ref[0][:, None, :]   # (T, tile_n, C) f32
    o_ref[0] = out.reshape(t, tile_n * c).astype(o_ref.dtype)


# ----------------------------- wrappers -----------------------------

def mlp(x2d, w1, b1, w2, b2):
    """Fused Linear-GELU-Linear over row tiles: (M, D) -> (M, Cp) with Cp = w2.shape[1]
    (expected to be a multiple of 128 for lane-dense stores; caller slices real columns)."""
    M, D = x2d.shape
    Hh = w1.shape[1]
    Cp = w2.shape[1]
    # Row-tile sizing: cap rows per tile, but derive the tile from ceil(M / num_tiles) so padding
    # waste is < 8 rows (instead of up to a full tile when M is just above a tile boundary).
    num_tiles = max(1, -(-M // _ROW_TILE_CAP))
    tile_m = _round_up(-(-M // num_tiles), 8)
    m_pad = tile_m * num_tiles
    xp = x2d if m_pad == M else jnp.pad(x2d, ((0, m_pad - M), (0, 0)))
    # TODO(synk): add a K/hidden reduction grid axis with a VMEM accumulator once D or the hidden
    # width grows beyond a few hundred (weights are whole-array resident here).
    out = pl.pallas_call(
        _mlp_kernel,
        out_shape=jax.ShapeDtypeStruct((m_pad, Cp), jnp.float32),
        grid=(num_tiles,),
        in_specs=[
            pl.BlockSpec((tile_m, D), lambda i: (i, 0)),
            pl.BlockSpec((D, Hh), lambda i: (0, 0)),
            pl.BlockSpec((1, Hh), lambda i: (0, 0)),
            pl.BlockSpec((Hh, Cp), lambda i: (0, 0)),
            pl.BlockSpec((1, Cp), lambda i: (0, 0)),
        ],
        out_specs=pl.BlockSpec((tile_m, Cp), lambda i: (i, 0)),
        compiler_params=pltpu.CompilerParams(
            dimension_semantics=("parallel",),
            vmem_limit_bytes=_VMEM_LIMIT),
        cost_estimate=pl.CostEstimate(
            flops=2 * m_pad * D * Hh + 2 * m_pad * Hh * Cp,
            transcendentals=m_pad * Hh,
            bytes_accessed=4 * (m_pad * D + m_pad * Cp + D * Hh + Hh + Hh * Cp + Cp)),
    )(xp, w1, b1, w2, b2)
    return out if m_pad == M else out[:M]


def linear(x2d, w, b):
    """Single linear layer (M, D) @ (D, C) + b as one small Pallas kernel."""
    M, D = x2d.shape
    C = w.shape[1]
    num_tiles = max(1, -(-M // _ROW_TILE_CAP))
    tile_m = _round_up(-(-M // num_tiles), 8)
    m_pad = tile_m * num_tiles
    xp = x2d if m_pad == M else jnp.pad(x2d, ((0, m_pad - M), (0, 0)))
    out = pl.pallas_call(
        _linear_kernel,
        out_shape=jax.ShapeDtypeStruct((m_pad, C), jnp.float32),
        grid=(num_tiles,),
        in_specs=[
            pl.BlockSpec((tile_m, D), lambda i: (i, 0)),
            pl.BlockSpec((D, C), lambda i: (0, 0)),
            pl.BlockSpec((1, C), lambda i: (0, 0)),
        ],
        out_specs=pl.BlockSpec((tile_m, C), lambda i: (i, 0)),
        compiler_params=pltpu.CompilerParams(
            dimension_semantics=("parallel",),
            vmem_limit_bytes=_VMEM_LIMIT),
    )(xp, w, b)
    return out if m_pad == M else out[:M]


# ----------------------------- synthetic projectors -----------------------------

class AerialProjector:
    """projector(x, indices, sizes): fused per-token linear + unpooling onto the (H, W) grid,
    emitted directly in channels-first layout, gridded over (batch, H*W-tile)."""

    def __init__(self, key, embed_dim, out_channels):
        (k1,) = jax.random.split(key, 1)
        self.w = jax.random.normal(k1, (embed_dim, out_channels), jnp.float32) * 0.02
        self.b = jnp.zeros((1, out_channels), jnp.float32)
        self.out_channels = out_channels

    def __call__(self, x, indices, sizes):
        B, N, D = x.shape
        H, W = sizes
        C = self.out_channels
        HW = H * W
        # N on the lane axis -> dense index load inside the kernel
        idx = indices.astype(jnp.int32).reshape(B, 1, N)
        # H*W tiling keeps the (hw_tile, N) one-hot VMEM-bounded (v7x 64 MiB safe) and gives the
        # v7x megacore >= 2 parallel grid steps even when B == 1.
        if HW <= 512:
            hw_tile, hw_pad = HW, HW
        else:
            hw_tile = 512
            hw_pad = _round_up(HW, hw_tile)
        n_hw = hw_pad // hw_tile
        out = pl.pallas_call(
            _aerial_kernel,
            out_shape=jax.ShapeDtypeStruct((B, C, hw_pad), jnp.float32),
            grid=(B, n_hw),
            in_specs=[
                pl.BlockSpec((1, N, D), lambda b, h: (b, 0, 0)),
                pl.BlockSpec((1, 1, N), lambda b, h: (b, 0, 0)),
                pl.BlockSpec((D, C), lambda b, h: (0, 0)),
                pl.BlockSpec((1, C), lambda b, h: (0, 0)),
            ],
            out_specs=pl.BlockSpec((1, C, hw_tile), lambda b, h: (b, 0, h)),
            compiler_params=pltpu.CompilerParams(
                dimension_semantics=("parallel", "parallel"),
                vmem_limit_bytes=_VMEM_LIMIT),
            cost_estimate=pl.CostEstimate(
                flops=2 * B * n_hw * N * D * C + 2 * B * N * hw_pad * C,
                transcendentals=0,
                bytes_accessed=4 * (B * n_hw * (N * D + N) + B * C * hw_pad + D * C + C)),
        )(x, idx, self.w, self.b)
        out = out if hw_pad == HW else out[:, :, :HW]
        # (B, C, H*W) is already NCHW-contiguous: the reshape is free.
        return out.reshape(B, C, H, W)


class MonoProjector:
    """projector(x): fused Linear-GELU-Linear per token (single Pallas kernel)."""

    def __init__(self, key, embed_dim, hidden, out_dim):
        k1, k2 = jax.random.split(key)
        self.w1 = jax.random.normal(k1, (embed_dim, hidden), jnp.float32) * 0.02
        self.b1 = jnp.zeros((1, hidden), jnp.float32)
        self.out_dim = out_dim
        self.out_pad = _round_up(out_dim, 128)   # lane-dense output stores
        w2 = jax.random.normal(k2, (hidden, out_dim), jnp.float32) * 0.02
        self.w2 = jnp.pad(w2, ((0, 0), (0, self.out_pad - out_dim)))
        self.b2 = jnp.zeros((1, self.out_pad), jnp.float32)

    def __call__(self, x):
        B, N, D = x.shape
        y = mlp(x.reshape(B * N, D), self.w1, self.b1, self.w2, self.b2)
        return y[:, :self.out_dim].reshape(B, N, self.out_dim)


def sinusoidal_embed(dates, dim):
    """dates: (B, T) float day values -> (B, T, dim) sinusoidal embedding (tiny plain-JAX glue)."""
    half = dim // 2
    freqs = jnp.exp(-jnp.log(10000.0) * jnp.arange(half, dtype=jnp.float32) / half)
    ang = dates[..., None] * freqs
    return jnp.concatenate([jnp.sin(ang), jnp.cos(ang)], axis=-1)


class TimeSeriesProjector:
    """projector(x, attention, dates): hoisted date head (tiny kernel) + fused token-head /
    attention-combine kernel gridded over (batch, token-tile) with a lane-dense output."""

    def __init__(self, key, embed_dim, date_dim, out_channels):
        k1, k2 = jax.random.split(key)
        self.wx = jax.random.normal(k1, (embed_dim, out_channels), jnp.float32) * 0.02
        self.bx = jnp.zeros((1, out_channels), jnp.float32)
        self.wd = jax.random.normal(k2, (date_dim, out_channels), jnp.float32) * 0.02
        self.bd = jnp.zeros((1, out_channels), jnp.float32)
        self.date_dim = date_dim
        self.out_channels = out_channels

    def __call__(self, x, attention, dates):
        B, N, D = x.shape
        T = dates.shape[1]
        C = self.out_channels
        DD = self.date_dim

        # Date head hoisted out of the token-tile loop: computed once per call by a tiny kernel;
        # its (B, T, C) result is an input to the fused kernel (no per-tile recompute).
        demb = sinusoidal_embed(dates.astype(jnp.float32), DD)              # (B, T, DD)
        dc = linear(demb.reshape(B * T, DD), self.wd, self.bd).reshape(B, T, C)

        # tile_n <= 128 bounds the (T, tile_n, C) combine temporary (vreg pressure) and gives
        # >= 2 parallel grid steps for the v7x megacore once N > 128; tile_n must be a multiple of
        # 128 (attention lane dim) or the full extent.
        if N <= 128:
            tile_n, n_pad = N, N
        else:
            tile_n = 128
            n_pad = _round_up(N, tile_n)
        xp = x if n_pad == N else jnp.pad(x, ((0, 0), (0, n_pad - N), (0, 0)))
        attp = attention if n_pad == N else jnp.pad(attention, ((0, 0), (0, 0), (0, n_pad - N)))

        out = pl.pallas_call(
            _ts_fused_kernel,
            out_shape=jax.ShapeDtypeStruct((B, T, n_pad * C), jnp.float32),
            grid=(B, n_pad // tile_n),
            in_specs=[
                pl.BlockSpec((1, tile_n, D), lambda b, n: (b, n, 0)),
                pl.BlockSpec((1, T, tile_n), lambda b, n: (b, 0, n)),
                pl.BlockSpec((1, T, C), lambda b, n: (b, 0, 0)),
                pl.BlockSpec((D, C), lambda b, n: (0, 0)),
                pl.BlockSpec((1, C), lambda b, n: (0, 0)),
            ],
            out_specs=pl.BlockSpec((1, T, tile_n * C), lambda b, n: (b, 0, n)),
            compiler_params=pltpu.CompilerParams(
                dimension_semantics=("parallel", "parallel"),
                vmem_limit_bytes=_VMEM_LIMIT),
            cost_estimate=pl.CostEstimate(
                flops=2 * B * n_pad * D * C + 3 * B * T * n_pad * C,
                transcendentals=0,
                bytes_accessed=4 * (B * n_pad * D + B * T * n_pad + B * T * C
                                    + B * T * n_pad * C + D * C + C)),
        )(xp, attp, dc, self.wx, self.bx)

        out = out.reshape(B, T, n_pad, C)   # free: row-major split of the lane-dense last dim
        return out if n_pad == N else out[:, :, :N, :]


# ----------------------------- the module -----------------------------

class DecoderModalities:
    """JAX/Pallas port of the PyTorch DecoderModalities dispatcher."""

    def __init__(self, projectors: dict = {}, modalities: list = []):
        self.modalities = modalities
        for m in modalities:
            setattr(self, '_'.join(['projector', m]), projectors[m])

    def forward(self, x, att):
        # TODO(synk): fuse the shared first-layer matmuls (aerial w, mono w1, TS wx all consume the
        # same x) into one concatenated (D, C_aer+hidden+C_ts) pallas matmul and split the columns;
        # skipped here because projectors are supplied externally as independent modules.
        for m in self.modalities:
            proj = getattr(self, '_'.join(['projector', m]))
            if m == 'aerial':
                att['_'.join(['reconstruct', m])] = proj(x, att['indices'], att['sizes'])
            elif m.split('-')[-1] == 'mono':
                att['_'.join(['reconstruct', m])] = proj(x)
            else:
                att['_'.join(['reconstruct', m])] = proj(
                    x, att['_'.join(['attention', m])], att['_'.join(['dates', m])])
        return att

    __call__ = forward


# ----------------------------- pure-JAX references (correctness check) -----------------------------

def _ref_aerial(x, indices, sizes, proj):
    B, N, _ = x.shape
    H, W = sizes
    tok = x.reshape(B * N, -1) @ proj.w + proj.b
    tok = tok.reshape(B, N, -1)
    grid = jnp.zeros((B, H * W, tok.shape[-1]), jnp.float32)
    grid = grid.at[jnp.arange(B)[:, None], indices].set(tok)
    return jnp.transpose(grid.reshape(B, H, W, -1), (0, 3, 1, 2))


def _ref_mono(x, proj):
    B, N, D = x.shape
    h = x.reshape(B * N, D) @ proj.w1 + proj.b1
    h = jax.nn.gelu(h, approximate=True)
    y = h @ proj.w2[:, :proj.out_dim] + proj.b2[:, :proj.out_dim]
    return y.reshape(B, N, -1)


def _ref_ts(x, attention, dates, proj):
    xc = x @ proj.wx + proj.bx
    demb = sinusoidal_embed(dates.astype(jnp.float32), proj.date_dim)
    dc = demb @ proj.wd + proj.bd
    return attention[:, :, :, None] * xc[:, None, :, :] + dc[:, :, None, :]


def _check(name, got, want, rtol=0.1, atol=3e-3):
    err = float(jnp.max(jnp.abs(got.astype(jnp.float32) - want.astype(jnp.float32))))
    tol = float(atol + rtol * jnp.max(jnp.abs(want)))
    assert err <= tol, f"{name}: max abs err {err:.3e} > tol {tol:.3e}"


# ----------------------------- demo -----------------------------

if __name__ == "__main__":
    B, N, D = 2, 16, 32          # batch, tokens, embed dim
    H_GRID, W_GRID = 8, 8        # aerial output spatial size
    T = 8                        # number of time-series dates
    C_AER, C_TS = 4, 16          # aerial / time-series output channels
    MONO_HID, MONO_OUT = 64, 10  # mono MLP sizes
    DATE_DIM = 16

    key = jax.random.PRNGKey(0)
    kx, ki, ka, kd, kp1, kp2, kp3 = jax.random.split(key, 7)

    x = jax.random.normal(kx, (B, N, D), jnp.float32)

    # token -> flat grid position indices (unique per batch element)
    perms = jnp.stack(
        [jax.random.permutation(jax.random.fold_in(ki, b), H_GRID * W_GRID)[:N]
         for b in range(B)], axis=0).astype(jnp.int32)

    attention_s1 = jax.nn.softmax(jax.random.normal(ka, (B, T, N), jnp.float32), axis=1)
    dates_s1 = jax.random.randint(kd, (B, T), 0, 365).astype(jnp.float32)

    modalities = ['aerial', 's2-mono', 's1']
    projectors = {
        'aerial': AerialProjector(kp1, D, C_AER),
        's2-mono': MonoProjector(kp2, D, MONO_HID, MONO_OUT),
        's1': TimeSeriesProjector(kp3, D, DATE_DIM, C_TS),
    }
    decoder = DecoderModalities(projectors=projectors, modalities=modalities)

    att_arrays = {
        'indices': perms,
        'attention_s1': attention_s1,
        'dates_s1': dates_s1,
    }

    @jax.jit
    def run(x_in, att_in):
        att = dict(att_in)
        att['sizes'] = (H_GRID, W_GRID)   # static spatial size (not a traced value)
        return decoder(x_in, att)

    out = run(x, att_arrays)

    r_aer = jax.block_until_ready(out['reconstruct_aerial'])
    r_mono = jax.block_until_ready(out['reconstruct_s2-mono'])
    r_s1 = jax.block_until_ready(out['reconstruct_s1'])

    assert r_aer.shape == (B, C_AER, H_GRID, W_GRID)
    assert r_mono.shape == (B, N, MONO_OUT)
    assert r_s1.shape == (B, T, N, C_TS)

    # loose-tolerance reference check (on TPU hardware the f32 matmuls run as bf16 MXU passes)
    _check('aerial', r_aer, _ref_aerial(x, perms, (H_GRID, W_GRID), projectors['aerial']))
    _check('mono', r_mono, _ref_mono(x, projectors['s2-mono']))
    _check('s1', r_s1, _ref_ts(x, attention_s1, dates_s1, projectors['s1']))

    print("KERNEL_OK")
</pallas_src>

<mosaic_0001>
module attributes {stable_mosaic.version = 11 : i64} {
  func.func @_linear_kernel(%arg0: i32, %arg1: memref<16x16xf32, #tpu.memory_space<vmem>>, %arg2: memref<16x16xf32, #tpu.memory_space<vmem>>, %arg3: memref<1x16xf32, #tpu.memory_space<vmem>>, %arg4: memref<16x16xf32, #tpu.memory_space<vmem>>) attributes {dimension_semantics = [#tpu.dimension_semantics<parallel>], iteration_bounds = array<i64: 1>, scalar_prefetch = 0 : i64, scratch_operands = 0 : i64, tpu.core_type = #tpu.core_type<tc>, window_params = [{transform_indices = @transform_0, window_bounds = array<i64: 16, 16>}, {pipeline_mode = #tpu.pipeline_mode<synchronous>, transform_indices = @transform_1, window_bounds = array<i64: 16, 16>}, {pipeline_mode = #tpu.pipeline_mode<synchronous>, transform_indices = @transform_2, window_bounds = array<i64: 1, 16>}, {transform_indices = @transform_3, window_bounds = array<i64: 16, 16>}]} {
    %c0 = arith.constant 0 : index
    %c0_0 = arith.constant 0 : index
    %0 = vector.load %arg1[%c0, %c0_0] : memref<16x16xf32, #tpu.memory_space<vmem>>, vector<16x16xf32>
    %c0_1 = arith.constant 0 : index
    %c0_2 = arith.constant 0 : index
    %1 = vector.load %arg2[%c0_1, %c0_2] : memref<16x16xf32, #tpu.memory_space<vmem>>, vector<16x16xf32>
    %cst = arith.constant dense<0.000000e+00> : vector<16x16xf32>
    %2 = tpu.matmul %0, %1, %cst {dimension_numbers = #tpu.dot_dimension_numbers<[1], [0], [0], [1], [0, 0, 1, 1], [], []>} : vector<16x16xf32>, vector<16x16xf32>, vector<16x16xf32> -> vector<16x16xf32>
    %c0_3 = arith.constant 0 : index
    %c0_4 = arith.constant 0 : index
    %3 = vector.load %arg3[%c0_3, %c0_4] : memref<1x16xf32, #tpu.memory_space<vmem>>, vector<1x16xf32>
    %4 = vector.broadcast %3 : vector<1x16xf32> to vector<16x16xf32>
    %5 = arith.addf %2, %4 : vector<16x16xf32>
    %c0_5 = arith.constant 0 : index
    %c0_6 = arith.constant 0 : index
    %6 = vector.load %arg4[%c0_5, %c0_6] : memref<16x16xf32, #tpu.memory_space<vmem>>, vector<16x16xf32>
    tpu.vector_store %arg4[%c0_5, %c0_6], %5 {strides = array<i32>} : memref<16x16xf32, #tpu.memory_space<vmem>>, vector<16x16xf32>,
    return
  }
  func.func @transform_0(%arg0: i32) -> (i32, i32) {
    %c0_i32 = arith.constant 0 : i32
    %c0_i32_0 = arith.constant 0 : i32
    return %arg0, %c0_i32 : i32, i32
  }
  func.func @transform_1(%arg0: i32) -> (i32, i32) {
    %c0_i32 = arith.constant 0 : i32
    %c0_i32_0 = arith.constant 0 : i32
    %c0_i32_1 = arith.constant 0 : i32
    return %c0_i32, %c0_i32_0 : i32, i32
  }
  func.func @transform_2(%arg0: i32) -> (i32, i32) {
    %c0_i32 = arith.constant 0 : i32
    %c0_i32_0 = arith.constant 0 : i32
    %c0_i32_1 = arith.constant 0 : i32
    return %c0_i32, %c0_i32_0 : i32, i32
  }
  func.func @transform_3(%arg0: i32) -> (i32, i32) {
    %c0_i32 = arith.constant 0 : i32
    %c0_i32_0 = arith.constant 0 : i32
    return %arg0, %c0_i32 : i32, i32
  }
}

module attributes {stable_mosaic.version = 11 : i64} {
  func.func @_ts_fused_kernel(%arg0: i32, %arg1: i32, %arg2: memref<1x16x32xf32, #tpu.memory_space<vmem>>, %arg3: memref<1x8x16xf32, #tpu.memory_space<vmem>>, %arg4: memref<1x8x16xf32, #tpu.memory_space<vmem>>, %arg5: memref<32x16xf32, #tpu.memory_space<vmem>>, %arg6: memref<1x16xf32, #tpu.memory_space<vmem>>, %arg7: memref<1x8x256xf32, #tpu.memory_space<vmem>>) attributes {dimension_semantics = [#tpu.dimension_semantics<parallel>, #tpu.dimension_semantics<parallel>], iteration_bounds = array<i64: 2, 1>, scalar_prefetch = 0 : i64, scratch_operands = 0 : i64, tpu.core_type = #tpu.core_type<tc>, window_params = [{transform_indices = @transform_0, window_bounds = array<i64: 1, 16, 32>}, {transform_indices = @transform_1, window_bounds = array<i64: 1, 8, 16>}, {transform_indices = @transform_2, window_bounds = array<i64: 1, 8, 16>}, {pipeline_mode = #tpu.pipeline_mode<synchronous>, transform_indices = @transform_3, window_bounds = array<i64: 32, 16>}, {pipeline_mode = #tpu.pipeline_mode<synchronous>, transform_indices = @transform_4, window_bounds = array<i64: 1, 16>}, {transform_indices = @transform_5, window_bounds = array<i64: 1, 8, 256>}]} {
    %c0 = arith.constant 0 : index
    %c0_0 = arith.constant 0 : index
    %c0_1 = arith.constant 0 : index
    %0 = vector.load %arg2[%c0, %c0_0, %c0_1] : memref<1x16x32xf32, #tpu.memory_space<vmem>>, vector<1x16x32xf32>
    %1 = vector.shape_cast %0 : vector<1x16x32xf32> to vector<16x32xf32>
    %c0_2 = arith.constant 0 : index
    %c0_3 = arith.constant 0 : index
    %2 = vector.load %arg5[%c0_2, %c0_3] : memref<32x16xf32, #tpu.memory_space<vmem>>, vector<32x16xf32>
    %cst = arith.constant dense<0.000000e+00> : vector<16x16xf32>
    %3 = tpu.matmul %1, %2, %cst {dimension_numbers = #tpu.dot_dimension_numbers<[1], [0], [0], [1], [0, 0, 1, 1], [], []>} : vector<16x32xf32>, vector<32x16xf32>, vector<16x16xf32> -> vector<16x16xf32>
    %c0_4 = arith.constant 0 : index
    %c0_5 = arith.constant 0 : index
    %4 = vector.load %arg6[%c0_4, %c0_5] : memref<1x16xf32, #tpu.memory_space<vmem>>, vector<1x16xf32>
    %5 = vector.broadcast %4 : vector<1x16xf32> to vector<16x16xf32>
    %6 = arith.addf %3, %5 : vector<16x16xf32>
    %c0_6 = arith.constant 0 : index
    %c0_7 = arith.constant 0 : index
    %c0_8 = arith.constant 0 : index
    %7 = vector.load %arg3[%c0_6, %c0_7, %c0_8] : memref<1x8x16xf32, #tpu.memory_space<vmem>>, vector<1x8x16xf32>
    %8 = vector.shape_cast %7 : vector<1x8x16xf32> to vector<8x16xf32>
    %9 = vector.shape_cast %8 : vector<8x16xf32> to vector<8x16x1xf32>
    %10 = vector.shape_cast %6 : vector<16x16xf32> to vector<1x16x16xf32>
    %11 = vector.broadcast %9 : vector<8x16x1xf32> to vector<8x16x16xf32>
    %12 = vector.broadcast %10 : vector<1x16x16xf32> to vector<8x16x16xf32>
    %13 = arith.mulf %11, %12 : vector<8x16x16xf32>
    %c0_9 = arith.constant 0 : index
    %c0_10 = arith.constant 0 : index
    %c0_11 = arith.constant 0 : index
    %14 = vector.load %arg4[%c0_9, %c0_10, %c0_11] : memref<1x8x16xf32, #tpu.memory_space<vmem>>, vector<1x8x16xf32>
    %15 = vector.shape_cast %14 : vector<1x8x16xf32> to vector<8x16xf32>
    %16 = vector.shape_cast %15 : vector<8x16xf32> to vector<8x1x16xf32>
    %17 = vector.broadcast %16 : vector<8x1x16xf32> to vector<8x16x16xf32>
    %18 = arith.addf %13, %17 : vector<8x16x16xf32>
    %19 = vector.shape_cast %18 : vector<8x16x16xf32> to vector<8x256xf32>
    %c0_12 = arith.constant 0 : index
    %c0_13 = arith.constant 0 : index
    %c0_14 = arith.constant 0 : index
    %20 = vector.load %arg7[%c0_12, %c0_13, %c0_14] : memref<1x8x256xf32, #tpu.memory_space<vmem>>, vector<1x8x256xf32>
    %21 = vector.shape_cast %20 : vector<1x8x256xf32> to vector<8x256xf32>
    %22 = vector.shape_cast %19 : vector<8x256xf32> to vector<1x8x256xf32>
    tpu.vector_store %arg7[%c0_12, %c0_13, %c0_14], %22 {strides = array<i32>} : memref<1x8x256xf32, #tpu.memory_space<vmem>>, vector<1x8x256xf32>,
    return
  }
  func.func @transform_0(%arg0: i32, %arg1: i32) -> (i32, i32, i32) {
    %c0_i32 = arith.constant 0 : i32
    %c0_i32_0 = arith.constant 0 : i32
    return %arg0, %arg1, %c0_i32 : i32, i32, i32
  }
  func.func @transform_1(%arg0: i32, %arg1: i32) -> (i32, i32, i32) {
    %c0_i32 = arith.constant 0 : i32
    %c0_i32_0 = arith.constant 0 : i32
    return %arg0, %c0_i32, %arg1 : i32, i32, i32
  }
  func.func @transform_2(%arg0: i32, %arg1: i32) -> (i32, i32, i32) {
    %c0_i32 = arith.constant 0 : i32
    %c0_i32_0 = arith.constant 0 : i32
    %c0_i32_1 = arith.constant 0 : i32
    return %arg0, %c0_i32, %c0_i32_0 : i32, i32, i32
  }
  func.func @transform_3(%arg0: i32, %arg1: i32) -> (i32, i32) {
    %c0_i32 = arith.constant 0 : i32
    %c0_i32_0 = arith.constant 0 : i32
    %c0_i32_1 = arith.constant 0 : i32
    return %c0_i32, %c0_i32_0 : i32, i32
  }
  func.func @transform_4(%arg0: i32, %arg1: i32) -> (i32, i32) {
    %c0_i32 = arith.constant 0 : i32
    %c0_i32_0 = arith.constant 0 : i32
    %c0_i32_1 = arith.constant 0 : i32
    return %c0_i32, %c0_i32_0 : i32, i32
  }
  func.func @transform_5(%arg0: i32, %arg1: i32) -> (i32, i32, i32) {
    %c0_i32 = arith.constant 0 : i32
    %c0_i32_0 = arith.constant 0 : i32
    return %arg0, %c0_i32, %arg1 : i32, i32, i32
  }
}

module attributes {stable_mosaic.version = 11 : i64} {
  func.func @_aerial_kernel(%arg0: i32, %arg1: i32, %arg2: memref<1x16x32xf32, #tpu.memory_space<vmem>>, %arg3: memref<1x1x16xi32, #tpu.memory_space<vmem>>, %arg4: memref<32x4xf32, #tpu.memory_space<vmem>>, %arg5: memref<1x4xf32, #tpu.memory_space<vmem>>, %arg6: memref<1x4x64xf32, #tpu.memory_space<vmem>>) attributes {dimension_semantics = [#tpu.dimension_semantics<parallel>, #tpu.dimension_semantics<parallel>], iteration_bounds = array<i64: 2, 1>, scalar_prefetch = 0 : i64, scratch_operands = 0 : i64, tpu.core_type = #tpu.core_type<tc>, window_params = [{transform_indices = @transform_0, window_bounds = array<i64: 1, 16, 32>}, {transform_indices = @transform_1, window_bounds = array<i64: 1, 1, 16>}, {pipeline_mode = #tpu.pipeline_mode<synchronous>, transform_indices = @transform_2, window_bounds = array<i64: 32, 4>}, {pipeline_mode = #tpu.pipeline_mode<synchronous>, transform_indices = @transform_3, window_bounds = array<i64: 1, 4>}, {transform_indices = @transform_4, window_bounds = array<i64: 1, 4, 64>}]} {
    %c0 = arith.constant 0 : index
    %c0_0 = arith.constant 0 : index
    %c0_1 = arith.constant 0 : index
    %0 = vector.load %arg2[%c0, %c0_0, %c0_1] : memref<1x16x32xf32, #tpu.memory_space<vmem>>, vector<1x16x32xf32>
    %1 = vector.shape_cast %0 : vector<1x16x32xf32> to vector<16x32xf32>
    %c0_2 = arith.constant 0 : index
    %c0_3 = arith.constant 0 : index
    %2 = vector.load %arg4[%c0_2, %c0_3] : memref<32x4xf32, #tpu.memory_space<vmem>>, vector<32x4xf32>
    %cst = arith.constant dense<0.000000e+00> : vector<16x4xf32>
    %3 = tpu.matmul %1, %2, %cst {dimension_numbers = #tpu.dot_dimension_numbers<[1], [0], [0], [1], [0, 0, 1, 1], [], []>} : vector<16x32xf32>, vector<32x4xf32>, vector<16x4xf32> -> vector<16x4xf32>
    %c0_4 = arith.constant 0 : index
    %c0_5 = arith.constant 0 : index
    %4 = vector.load %arg5[%c0_4, %c0_5] : memref<1x4xf32, #tpu.memory_space<vmem>>, vector<1x4xf32>
    %5 = vector.broadcast %4 : vector<1x4xf32> to vector<16x4xf32>
    %6 = arith.addf %3, %5 : vector<16x4xf32>
    %c64_i32 = arith.constant 64 : i32
    %7 = arith.muli %arg1, %c64_i32 : i32
    %8 = tpu.iota {dimensions = array<i32: 0>} : vector<64x16xi32>
    %9 = vector.broadcast %7 : i32 to vector<64x16xi32>
    %10 = arith.addi %8, %9 : vector<64x16xi32>
    %c0_6 = arith.constant 0 : index
    %c0_7 = arith.constant 0 : index
    %c0_8 = arith.constant 0 : index
    %11 = vector.load %arg3[%c0_6, %c0_7, %c0_8] : memref<1x1x16xi32, #tpu.memory_space<vmem>>, vector<1x1x16xi32>
    %12 = vector.shape_cast %11 : vector<1x1x16xi32> to vector<1x16xi32>
    %13 = vector.broadcast %12 : vector<1x16xi32> to vector<64x16xi32>
    %14 = arith.cmpi eq, %10, %13 : vector<64x16xi32>
    %15 = arith.extui %14 : vector<64x16xi1> to vector<64x16xi32>
    %16 = arith.sitofp %15 : vector<64x16xi32> to vector<64x16xf32>
    %cst_9 = arith.constant dense<0.000000e+00> : vector<4x64xf32>
    %17 = tpu.matmul %6, %16, %cst_9 {dimension_numbers = #tpu.dot_dimension_numbers<[0], [1], [1], [0], [0, 1, 1, 0], [], []>} : vector<16x4xf32>, vector<64x16xf32>, vector<4x64xf32> -> vector<4x64xf32>
    %c0_10 = arith.constant 0 : index
    %c0_11 = arith.constant 0 : index
    %c0_12 = arith.constant 0 : index
    %18 = vector.load %arg6[%c0_10, %c0_11, %c0_12] : memref<1x4x64xf32, #tpu.memory_space<vmem>>, vector<1x4x64xf32>
    %19 = vector.shape_cast %18 : vector<1x4x64xf32> to vector<4x64xf32>
    %20 = vector.shape_cast %17 : vector<4x64xf32> to vector<1x4x64xf32>
    tpu.vector_store %arg6[%c0_10, %c0_11, %c0_12], %20 {strides = array<i32>} : memref<1x4x64xf32, #tpu.memory_space<vmem>>, vector<1x4x64xf32>,
    return
  }
  func.func @transform_0(%arg0: i32, %arg1: i32) -> (i32, i32, i32) {
    %c0_i32 = arith.constant 0 : i32
    %c0_i32_0 = arith.constant 0 : i32
    %c0_i32_1 = arith.constant 0 : i32
    return %arg0, %c0_i32, %c0_i32_0 : i32, i32, i32
  }
  func.func @transform_1(%arg0: i32, %arg1: i32) -> (i32, i32, i32) {
    %c0_i32 = arith.constant 0 : i32
    %c0_i32_0 = arith.constant 0 : i32
    %c0_i32_1 = arith.constant 0 : i32
    return %arg0, %c0_i32, %c0_i32_0 : i32, i32, i32
  }
  func.func @transform_2(%arg0: i32, %arg1: i32) -> (i32, i32) {
    %c0_i32 = arith.constant 0 : i32
    %c0_i32_0 = arith.constant 0 : i32
    %c0_i32_1 = arith.constant 0 : i32
    return %c0_i32, %c0_i32_0 : i32, i32
  }
  func.func @transform_3(%arg0: i32, %arg1: i32) -> (i32, i32) {
    %c0_i32 = arith.constant 0 : i32
    %c0_i32_0 = arith.constant 0 : i32
    %c0_i32_1 = arith.constant 0 : i32
    return %c0_i32, %c0_i32_0 : i32, i32
  }
  func.func @transform_4(%arg0: i32, %arg1: i32) -> (i32, i32, i32) {
    %c0_i32 = arith.constant 0 : i32
    %c0_i32_0 = arith.constant 0 : i32
    return %arg0, %c0_i32, %arg1 : i32, i32, i32
  }
}

module attributes {stable_mosaic.version = 11 : i64} {
  func.func @_mlp_kernel(%arg0: i32, %arg1: memref<32x32xf32, #tpu.memory_space<vmem>>, %arg2: memref<32x64xf32, #tpu.memory_space<vmem>>, %arg3: memref<1x64xf32, #tpu.memory_space<vmem>>, %arg4: memref<64x128xf32, #tpu.memory_space<vmem>>, %arg5: memref<1x128xf32, #tpu.memory_space<vmem>>, %arg6: memref<32x128xf32, #tpu.memory_space<vmem>>) attributes {dimension_semantics = [#tpu.dimension_semantics<parallel>], iteration_bounds = array<i64: 1>, scalar_prefetch = 0 : i64, scratch_operands = 0 : i64, tpu.core_type = #tpu.core_type<tc>, window_params = [{transform_indices = @transform_0, window_bounds = array<i64: 32, 32>}, {pipeline_mode = #tpu.pipeline_mode<synchronous>, transform_indices = @transform_1, window_bounds = array<i64: 32, 64>}, {pipeline_mode = #tpu.pipeline_mode<synchronous>, transform_indices = @transform_2, window_bounds = array<i64: 1, 64>}, {pipeline_mode = #tpu.pipeline_mode<synchronous>, transform_indices = @transform_3, window_bounds = array<i64: 64, 128>}, {pipeline_mode = #tpu.pipeline_mode<synchronous>, transform_indices = @transform_4, window_bounds = array<i64: 1, 128>}, {transform_indices = @transform_5, window_bounds = array<i64: 32, 128>}]} {
    %c0 = arith.constant 0 : index
    %c0_0 = arith.constant 0 : index
    %0 = vector.load %arg1[%c0, %c0_0] : memref<32x32xf32, #tpu.memory_space<vmem>>, vector<32x32xf32>
    %c0_1 = arith.constant 0 : index
    %c0_2 = arith.constant 0 : index
    %1 = vector.load %arg2[%c0_1, %c0_2] : memref<32x64xf32, #tpu.memory_space<vmem>>, vector<32x64xf32>
    %cst = arith.constant dense<0.000000e+00> : vector<32x64xf32>
    %2 = tpu.matmul %0, %1, %cst {dimension_numbers = #tpu.dot_dimension_numbers<[1], [0], [0], [1], [0, 0, 1, 1], [], []>} : vector<32x32xf32>, vector<32x64xf32>, vector<32x64xf32> -> vector<32x64xf32>
    %c0_3 = arith.constant 0 : index
    %c0_4 = arith.constant 0 : index
    %3 = vector.load %arg3[%c0_3, %c0_4] : memref<1x64xf32, #tpu.memory_space<vmem>>, vector<1x64xf32>
    %4 = vector.broadcast %3 : vector<1x64xf32> to vector<32x64xf32>
    %5 = arith.addf %2, %4 : vector<32x64xf32>
    %6 = arith.mulf %5, %5 : vector<32x64xf32>
    %7 = arith.mulf %5, %6 : vector<32x64xf32>
    %cst_5 = arith.constant 4.471500e-02 : f32
    %8 = vector.broadcast %cst_5 : f32 to vector<32x64xf32>
    %9 = arith.mulf %8, %7 : vector<32x64xf32>
    %10 = arith.addf %5, %9 : vector<32x64xf32>
    %cst_6 = arith.constant 0.797884583 : f32
    %11 = vector.broadcast %cst_6 : f32 to vector<32x64xf32>
    %12 = arith.mulf %11, %10 : vector<32x64xf32>
    %13 = math.tanh %12 : vector<32x64xf32>
    %cst_7 = arith.constant 1.000000e+00 : f32
    %14 = vector.broadcast %cst_7 : f32 to vector<32x64xf32>
    %15 = arith.addf %14, %13 : vector<32x64xf32>
    %cst_8 = arith.constant 5.000000e-01 : f32
    %16 = vector.broadcast %cst_8 : f32 to vector<32x64xf32>
    %17 = arith.mulf %16, %15 : vector<32x64xf32>
    %18 = arith.mulf %5, %17 : vector<32x64xf32>
    %c0_9 = arith.constant 0 : index
    %c0_10 = arith.constant 0 : index
    %19 = vector.load %arg4[%c0_9, %c0_10] : memref<64x128xf32, #tpu.memory_space<vmem>>, vector<64x128xf32>
    %cst_11 = arith.constant dense<0.000000e+00> : vector<32x128xf32>
    %20 = tpu.matmul %18, %19, %cst_11 {dimension_numbers = #tpu.dot_dimension_numbers<[1], [0], [0], [1], [0, 0, 1, 1], [], []>} : vector<32x64xf32>, vector<64x128xf32>, vector<32x128xf32> -> vector<32x128xf32>
    %c0_12 = arith.constant 0 : index
    %c0_13 = arith.constant 0 : index
    %21 = vector.load %arg5[%c0_12, %c0_13] : memref<1x128xf32, #tpu.memory_space<vmem>>, vector<1x128xf32>
    %22 = vector.broadcast %21 : vector<1x128xf32> to vector<32x128xf32>
    %23 = arith.addf %20, %22 : vector<32x128xf32>
    %c0_14 = arith.constant 0 : index
    %c0_15 = arith.constant 0 : index
    %24 = vector.load %arg6[%c0_14, %c0_15] : memref<32x128xf32, #tpu.memory_space<vmem>>, vector<32x128xf32>
    tpu.vector_store %arg6[%c0_14, %c0_15], %23 {strides = array<i32>} : memref<32x128xf32, #tpu.memory_space<vmem>>, vector<32x128xf32>,
    return
  }
  func.func @transform_0(%arg0: i32) -> (i32, i32) {
    %c0_i32 = arith.constant 0 : i32
    %c0_i32_0 = arith.constant 0 : i32
    return %arg0, %c0_i32 : i32, i32
  }
  func.func @transform_1(%arg0: i32) -> (i32, i32) {
    %c0_i32 = arith.constant 0 : i32
    %c0_i32_0 = arith.constant 0 : i32
    %c0_i32_1 = arith.constant 0 : i32
    return %c0_i32, %c0_i32_0 : i32, i32
  }
  func.func @transform_2(%arg0: i32) -> (i32, i32) {
    %c0_i32 = arith.constant 0 : i32
    %c0_i32_0 = arith.constant 0 : i32
    %c0_i32_1 = arith.constant 0 : i32
    return %c0_i32, %c0_i32_0 : i32, i32
  }
  func.func @transform_3(%arg0: i32) -> (i32, i32) {
    %c0_i32 = arith.constant 0 : i32
    %c0_i32_0 = arith.constant 0 : i32
    %c0_i32_1 = arith.constant 0 : i32
    return %c0_i32, %c0_i32_0 : i32, i32
  }
  func.func @transform_4(%arg0: i32) -> (i32, i32) {
    %c0_i32 = arith.constant 0 : i32
    %c0_i32_0 = arith.constant 0 : i32
    %c0_i32_1 = arith.constant 0 : i32
    return %c0_i32, %c0_i32_0 : i32, i32
  }
  func.func @transform_5(%arg0: i32) -> (i32, i32) {
    %c0_i32 = arith.constant 0 : i32
    %c0_i32_0 = arith.constant 0 : i32
    return %arg0, %c0_i32 : i32, i32
  }
}

</mosaic_0001>

<llo_original>
// kernel: run.6
$region0: #{run.6}
  #allocation0 [shape = 'u32[]', space=smem, size = 0x4, offset = 0x4, fixed_abs, tag = 'smem constant byte address 0x4 - core index']
  #allocation1 [shape = 'u32[144,128]{1,0:T(1,128)}', space=vmem, size = 0x12000, scoped, tag = 'internal scratch']
  %s0 = inlined_call_operand.vmem [shape: f32[16,16], index: 0, kind: input, shape index: {}]
  %s1 = inlined_call_operand.vmem [shape: f32[16,16], index: 1, kind: input, shape index: {}]
  %s2 = inlined_call_operand.vmem [shape: f32[1,16], index: 2, kind: input, shape index: {}]
  %s3 = inlined_call_operand.vmem [shape: f32[16,16], index: 3, kind: output, shape index: {}]
  %s4 = sld [smem:[#allocation0]]
  $region22: #{run.6} parent=0
    _
  %s6 = ssub.s32 1, %s4
  %s7 = scalar_select 0, %s6, %s4
  // Predicated region
  $region2: #{run.6} parent=0 // pred_check
    _
  $region3: #{run.6} parent=0 // pred_check_branch
    %9 = sbr.rel (0) target = $region5
  $region4: #{run.6} parent=0 // pred_region
    _
  $region5: #{run.6} parent=0 // pred_fallthru
    _
  // Predicated region
  $region6: #{run.6} parent=0 // pred_check
    _
  $region7: #{run.6} parent=0 // pred_check_branch
    %11 = sbr.rel (0) target = $region9
  $region8: #{run.6} parent=0 // pred_region
    _
  $region9: #{run.6} parent=0 // pred_fallthru
    _
  // Predicated region
  $region10: #{run.6} parent=0 // pred_check
    _
  $region11: #{run.6} parent=0 // pred_check_branch
    %13 = sbr.rel (0) target = $region13
  $region12: #{run.6} parent=0 // pred_region
    _
  $region13: #{run.6} parent=0 // pred_fallthru
    _
  %v14 = vld [vmem:[%s0] sm:$0xff]
  %v15 = vld [vmem:[%s0 + $0x8] sm:$0xff]
  %v16 = vld [vmem:[%s1] sm:$0xff]
  %v17 = vld [vmem:[%s1 + $0x8] sm:$0xff]
  %v18 = vld [vmem:[%s2] sm:$0x1]
  %v20 = vlaneseq
  %v21 = vshrl.u32 %v20, 7
  %v22 = vsub.s32 0, %v21
  %v23 = vrot.slane %v18, %v22
  %vm25 = vcmask 130048
  %v27 = vsel %vm25, %v14, 0
  %v30 = vsel %vm25, %v15, 0
  %32 = vmatprep.subr.mxu0 0.0
  %33 = vmatpush1.msra.mxu0 0.0
  %34 = vmatprep.subr.mxu0 0.0
  %35 = vmatpush1.msra.mxu0 0.0
  %36 = vmatprep.subr.mxu0 0.0
  %37 = vmatpush1.msra.mxu0 0.0
  %38 = vmatprep.subr.mxu0 0.0
  %39 = vmatpush1.msra.mxu0 0.0
  %40 = vmatprep.subr.mxu0 0.0
  %41 = vmatpush1.msra.mxu0 0.0
  %42 = vmatprep.subr.mxu0 0.0
  %43 = vmatpush1.msra.mxu0 0.0
  %44 = vmatprep.subr.mxu0 0.0
  %45 = vmatpush1.msra.mxu0 0.0
  %46 = vmatprep.subr.mxu0 0.0
  %47 = vmatpush1.msra.mxu0 0.0
  %48 = vmatprep.subr.mxu0 0.0
  %49 = vmatpush1.msra.mxu0 0.0
  %50 = vmatprep.subr.mxu0 0.0
  %51 = vmatpush1.msra.mxu0 0.0
  %52 = vmatprep.subr.mxu0 0.0
  %53 = vmatpush1.msra.mxu0 0.0
  %54 = vmatprep.subr.mxu0 0.0
  %55 = vmatpush1.msra.mxu0 0.0
  %56 = vmatprep.subr.mxu0 0.0
  %57 = vmatpush1.msra.mxu0 0.0
  %58 = vmatprep.subr.mxu0 0.0
  %59 = vmatpush1.msra.mxu0 0.0
  %60 = vmatprep.subr.mxu0 0.0
  %61 = vmatpush1.msra.mxu0 %v17
  %62 = vmatprep.subr.mxu0 0.0
  %63 = vmatpush1.msra.mxu0 %v16
  %64 = vmatprep.subr.mxu0 0.0
  %65 = vmatpush2.msra.mxu0 0.0
  %66 = vmatprep.subr.mxu0 0.0
  %67 = vmatpush2.msra.mxu0 0.0
  %68 = vmatprep.subr.mxu0 0.0
  %69 = vmatpush2.msra.mxu0 0.0
  %70 = vmatprep.subr.mxu0 0.0
  %71 = vmatpush2.msra.mxu0 0.0
  %72 = vmatprep.subr.mxu0 0.0
  %73 = vmatpush2.msra.mxu0 0.0
  %74 = vmatprep.subr.mxu0 0.0
  %75 = vmatpush2.msra.mxu0 0.0
  %76 = vmatprep.subr.mxu0 0.0
  %77 = vmatpush2.msra.mxu0 0.0
  %78 = vmatprep.subr.mxu0 0.0
  %79 = vmatpush2.msra.mxu0 0.0
  %80 = vmatprep.subr.mxu0 0.0
  %81 = vmatpush2.msra.mxu0 0.0
  %82 = vmatprep.subr.mxu0 0.0
  %83 = vmatpush2.msra.mxu0 0.0
  %84 = vmatprep.subr.mxu0 0.0
  %85 = vmatpush2.msra.mxu0 0.0
  %86 = vmatprep.subr.mxu0 0.0
  %87 = vmatpush2.msra.mxu0 0.0
  %88 = vmatprep.subr.mxu0 0.0
  %89 = vmatpush2.msra.mxu0 0.0
  %90 = vmatprep.subr.mxu0 0.0
  %91 = vmatpush2.msra.mxu0 0.0
  %92 = vmatprep.subr.mxu0 0.0
  %93 = vmatpush2.msra.mxu0 0.0
  %94 = vmatprep.subr.mxu0 0.0
  %95 = vmatpush2.msra.mxu0 0.0
  %96 = vmatprep.mubr.f32.mxu0 0.0
  %97 = vmatmul.mubr.f32.gmra.mxu0 %v27
  %v98 = vpop.f32.mrf.mxu0
  %v99 = vadd.f32 %v23, %v98
  %v100 = vpop.f32.mrf.mxu0
  %101 = vmatprep.mubr.f32.mxu0 0.0
  %102 = vmatmul.mubr.f32.gmra.mxu0 %v30
  %v103 = vpop.f32.mrf.mxu0
  %v104 = vadd.f32 %v23, %v103
  %v105 = vpop.f32.mrf.mxu0
  %106 = vdwg.mxu0
  %107 = vst.msk [vmem:[%s3] sm:$0xff] %vm25, %v99
  %108 = vst.msk [vmem:[%s3 + $0x8] sm:$0xff] %vm25, %v104
  // Predicated region
  $region14: #{run.6} parent=0 // pred_check
    _
  $region15: #{run.6} parent=0 // pred_check_branch
    %110 = sbr.rel (0) target = $region17
  $region16: #{run.6} parent=0 // pred_region
    _
  $region17: #{run.6} parent=0 // pred_fallthru
    _
  // Predicated region
  $region18: #{run.6} parent=0 // pred_check
    _
  $region19: #{run.6} parent=0 // pred_check_branch
    %112 = sbr.rel (0) target = $region21
  $region20: #{run.6} parent=0 // pred_region
    _
  $region21: #{run.6} parent=0 // pred_fallthru
    _

// kernel: run.4
$region0: #{run.4}
  #allocation0 [shape = 'u32[]', space=smem, size = 0x4, offset = 0x4, fixed_abs, tag = 'smem constant byte address 0x4 - core index']
  #allocation1 [shape = 'u32[144,128]{1,0:T(1,128)}', space=vmem, size = 0x12000, scoped, tag = 'internal scratch']
  %s0 = inlined_call_operand.vmem [shape: f32[2,16,32], index: 0, kind: input, shape index: {}]
  %s1 = inlined_call_operand.vmem [shape: s32[2,1,16], index: 1, kind: input, shape index: {}]
  %s2 = inlined_call_operand.vmem [shape: f32[32,4], index: 2, kind: input, shape index: {}]
  %s3 = inlined_call_operand.vmem [shape: f32[1,4], index: 3, kind: input, shape index: {}]
  %s4 = inlined_call_operand.vmem [shape: f32[2,4,64], index: 4, kind: output, shape index: {}]
  %s5 = sld [smem:[#allocation0]]
  $region49: #{run.4} parent=0
    _
  %s7 = ssub.s32 1, %s5
  %s8 = scalar_select 0, %s7, %s5
  loop: start=0, step=1, limit=4
  $region2: #{run.4} parent=0 // loop_pre_header
    _
  $region3: #{run.4} parent=0 // loop_header
    %s10 = sphi 0, %s14
    %p11 = scmp.ge.s32.totalorder %s10, 4
    %s17 = sphi 0, %s29
    %s18 = sphi 0, %s25
    %s19 = sphi 0, %s17
    %s20 = sphi 0, %s18
    %s21 = sphi 0, %s19
    %s22 = sphi 0, %s20
    %s32 = sphi 0, %s34
    %s35 = sphi 0, %s32
    %s36 = sphi 0, %s35
    %s52 = sphi 0, %s36
    %s58 = sphi 0, %s60
    %s61 = sphi 0, %s58
    %s62 = sphi 0, %s61
    %s78 = sphi 0, %s62
    %s82 = sphi 0, %s82
    %s84 = sphi 0, %s82
    %s85 = sphi 0, %s84
    %s99 = sphi 0, %s85
    %s103 = sphi 0, %s103
    %s105 = sphi 0, %s103
    %s106 = sphi 0, %s105
    %s120 = sphi 0, %s106
    %s128 = sphi 0, %s130
    %s131 = sphi 0, %s128
    %s132 = sphi 0, %s131
    %s148 = sphi 0, %s132
  $region4: #{run.4} parent=0 // loop_header_branch
    %13 = sbr.rel (%p11) target = $region8
  $region5: #{run.4} parent=0 // loop_body
    %s15 = ssub.s32 %s10, 1
    %s16 = ssub.s32 %s10, 2
    %s23 = sadd.s32 1, %s18
    %p24 = scmp.ge.s32.totalorder %s23, 1
    %s25 = scalar_select %p24, 0, %s23
    %s26 = sadd.s32 1, %s17
    %s27 = scalar_select %p24, %s26, %s17
    %p28 = scmp.ge.s32.totalorder %s27, 2
    %s29 = scalar_select %p28, 0, %s27
    %s30 = ssub.s32 %s17, %s29
    %p31 = scmp.eq.s32.totalorder %s30, 0
    %s33 = sadd.s32 %s32, 1
    %s34 = scalar_select %p31, %s32, %s33
    %p37 = pneg %p31
    %p38 = scmp.eq.s32.totalorder %s10, 1
    %p39 = por %p37, %p38
    %p40 = scmp.ne.s32.totalorder %s32, %s35
    %p41 = scmp.eq.s32.totalorder %s10, 0
    %p42 = por %p40, %p41
    %p43 = scmp.ne.s32.totalorder %s32, %s35
    %p44 = scmp.eq.s32.totalorder %s15, 1
    %p45 = por %p43, %p44
    %p46 = scmp.ne.s32.totalorder %s35, %s36
    %p47 = scmp.eq.s32.totalorder %s15, 0
    %p48 = por %p46, %p47
    %p49 = scmp.ne.s32.totalorder %s35, %s36
    %p50 = scmp.eq.s32.totalorder %s16, 1
    %p51 = por %p49, %p50
    %p53 = scmp.ne.s32.totalorder %s36, %s52
    %p54 = scmp.eq.s32.totalorder %s16, 0
    %p55 = por %p53, %p54
    %s56 = ssub.s32 %s17, %s29
    %p57 = scmp.eq.s32.totalorder %s56, 0
    %s59 = sadd.s32 %s58, 1
    %s60 = scalar_select %p57, %s58, %s59
    %p63 = pneg %p57
    %p64 = scmp.eq.s32.totalorder %s10, 1
    %p65 = por %p63, %p64
    %p66 = scmp.ne.s32.totalorder %s58, %s61
    %p67 = scmp.eq.s32.totalorder %s10, 0
    %p68 = por %p66, %p67
    %p69 = scmp.ne.s32.totalorder %s58, %s61
    %p70 = scmp.eq.s32.totalorder %s15, 1
    %p71 = por %p69, %p70
    %p72 = scmp.ne.s32.totalorder %s61, %s62
    %p73 = scmp.eq.s32.totalorder %s15, 0
    %p74 = por %p72, %p73
    %p75 = scmp.ne.s32.totalorder %s61, %s62
    %p76 = scmp.eq.s32.totalorder %s16, 1
    %p77 = por %p75, %p76
    %p79 = scmp.ne.s32.totalorder %s62, %s78
    %p80 = scmp.eq.s32.totalorder %s16, 0
    %p81 = por %p79, %p80
    %s83 = sadd.s32 %s82, 1
    %p86 = scmp.eq.s32.totalorder %s10, 1
    %p87 = scmp.ne.s32.totalorder %s82, %s84
    %p88 = scmp.eq.s32.totalorder %s10, 0
    %p89 = por %p87, %p88
    %p90 = scmp.ne.s32.totalorder %s82, %s84
    %p91 = scmp.eq.s32.totalorder %s15, 1
    %p92 = por %p90, %p91
    %p93 = scmp.ne.s32.totalorder %s84, %s85
    %p94 = scmp.eq.s32.totalorder %s15, 0
    %p95 = por %p93, %p94
    %p96 = scmp.ne.s32.totalorder %s84, %s85
    %p97 = scmp.eq.s32.totalorder %s16, 1
    %p98 = por %p96, %p97
    %p100 = scmp.ne.s32.totalorder %s85, %s99
    %p101 = scmp.eq.s32.totalorder %s16, 0
    %p102 = por %p100, %p101
    %s104 = sadd.s32 %s103, 1
    %p107 = scmp.eq.s32.totalorder %s10, 1
    %p108 = scmp.ne.s32.totalorder %s103, %s105
    %p109 = scmp.eq.s32.totalorder %s10, 0
    %p110 = por %p108, %p109
    %p111 = scmp.ne.s32.totalorder %s103, %s105
    %p112 = scmp.eq.s32.totalorder %s15, 1
    %p113 = por %p111, %p112
    %p114 = scmp.ne.s32.totalorder %s105, %s106
    %p115 = scmp.eq.s32.totalorder %s15, 0
    %p116 = por %p114, %p115
    %p117 = scmp.ne.s32.totalorder %s105, %s106
    %p118 = scmp.eq.s32.totalorder %s16, 1
    %p119 = por %p117, %p118
    %p121 = scmp.ne.s32.totalorder %s106, %s120
    %p122 = scmp.eq.s32.totalorder %s16, 0
    %p123 = por %p121, %p122
    %s124 = ssub.s32 %s17, %s29
    %s125 = ssub.s32 %s18, %s25
    %s126 = sor.u32 %s124, %s125
    %p127 = scmp.eq.s32.totalorder %s126, 0
    %s129 = sadd.s32 %s128, 1
    %s130 = scalar_select %p127, %s128, %s129
    %p133 = pneg %p127
    %p134 = scmp.eq.s32.totalorder %s10, 1
    %p135 = por %p133, %p134
    %p136 = scmp.ne.s32.totalorder %s128, %s131
    %p137 = scmp.eq.s32.totalorder %s10, 0
    %p138 = por %p136, %p137
    %p139 = scmp.ne.s32.totalorder %s128, %s131
    %p140 = scmp.eq.s32.totalorder %s15, 1
    %p141 = por %p139, %p140
    %p142 = scmp.ne.s32.totalorder %s131, %s132
    %p143 = scmp.eq.s32.totalorder %s15, 0
    %p144 = por %p142, %p143
    %p145 = scmp.ne.s32.totalorder %s131, %s132
    %p146 = scmp.eq.s32.totalorder %s16, 1
    %p147 = por %p145, %p146
    %p149 = scmp.ne.s32.totalorder %s132, %s148
    %p150 = scmp.eq.s32.totalorder %s16, 0
    %p151 = por %p149, %p150
    %p152 = scmp.le.s32.totalorder 1, %s10
    %p153 = scmp.lt.s32.totalorder %s10, 3
    %p154 = pnand %p152, %p153
    %p155 = pneg %p154
    // Predicated region
    $region9: #{run.4} parent=5 // pred_check
      _
    $region10: #{run.4} parent=5 // pred_check_branch
      %157 = sbr.rel (%p154) target = $region12
    $region11: #{run.4} parent=5 // pred_region
      %s158 = ssub.s32 %s10, 1
      // Predicated region
      $region13: #{run.4} parent=11 // pred_check
        %p159 = pneg %p95
      $region14: #{run.4} parent=11 // pred_check_branch
        %161 = sbr.rel (%p159) target = $region16
      $region15: #{run.4} parent=11 // pred_region
        _
      $region16: #{run.4} parent=11 // pred_fallthru
        _
      // Predicated region
      $region17: #{run.4} parent=11 // pred_check
        %p162 = pneg %p116
      $region18: #{run.4} parent=11 // pred_check_branch
        %164 = sbr.rel (%p162) target = $region20
      $region19: #{run.4} parent=11 // pred_region
        _
      $region20: #{run.4} parent=11 // pred_fallthru
        _
    $region12: #{run.4} parent=5 // pred_fallthru
      _
    %p165 = scmp.lt.s32.totalorder %s10, 2
    // Predicated region
    $region21: #{run.4} parent=5 // pred_check
      %p166 = pneg %p165
    $region22: #{run.4} parent=5 // pred_check_branch
      %168 = sbr.rel (%p166) target = $region24
    $region23: #{run.4} parent=5 // pred_region
      // Predicated region
      $region25: #{run.4} parent=23 // pred_check
        %p169 = pneg %p42
      $region26: #{run.4} parent=23 // pred_check_branch
        %171 = sbr.rel (%p169) target = $region28
      $region27: #{run.4} parent=23 // pred_region
        %p172 = scmp.lt.s32.totalorder %s17, 1
        %s173 = scalar_select %p172, %s17, 1
        %s174 = smul.addr %s173, 2
        %s175 = smul.addr %s174, 8
        %s176 = scalar_lea.vmem %s0, %s175
      $region28: #{run.4} parent=23 // pred_fallthru
        _
      // Predicated region
      $region29: #{run.4} parent=23 // pred_check
        %p177 = pneg %p68
      $region30: #{run.4} parent=23 // pred_check_branch
        %179 = sbr.rel (%p177) target = $region32
      $region31: #{run.4} parent=23 // pred_region
        %p180 = scmp.lt.s32.totalorder %s17, 1
        %s181 = scalar_select %p180, %s17, 1
        %s182 = scalar_lea.vmem %s1, %s181
      $region32: #{run.4} parent=23 // pred_fallthru
        _
    $region24: #{run.4} parent=5 // pred_fallthru
      _
    %p183 = scmp.le.s32.totalorder 1, %s10
    %p184 = scmp.lt.s32.totalorder %s10, 3
    %p185 = pnand %p183, %p184
    %p186 = pneg %p185
    // Predicated region
    $region33: #{run.4} parent=5 // pred_check
      _
    $region34: #{run.4} parent=5 // pred_check_branch
      %188 = sbr.rel (%p185) target = $region36
    $region35: #{run.4} parent=5 // pred_region
      %s189 = ssub.s32 %s10, 1
      %p190 = scmp.lt.s32.totalorder %s19, 1
      %s191 = scalar_select %p190, %s19, 1
      %s192 = smul.addr %s191, 2
      %s193 = smul.addr %s192, 8
      %s194 = scalar_lea.vmem %s0, %s193
      %p195 = pneg %p48
      %p196 = pneg %p45
      %p197 = scmp.lt.s32.totalorder %s19, 1
      %s198 = scalar_select %p197, %s19, 1
      %s199 = scalar_lea.vmem %s1, %s198
      %p200 = pneg %p74
      %p201 = pneg %p71
      %p202 = pneg %p95
      %p203 = pneg %p92
      %p204 = pneg %p116
      %p205 = pneg %p113
      %p206 = pneg %p144
      %p207 = pneg %p141
      %p208 = scmp.lt.s32.totalorder %s19, 1
      %s209 = scalar_select %p208, %s19, 1
      %p210 = scmp.lt.s32.totalorder %s20, 0
      %s211 = scalar_select %p210, %s20, 0
      %s212 = sadd.s32 %s211, %s209
      %s213 = smul.addr %s212, 4
      %s214 = scalar_lea.vmem %s4, %s213
      %p215 = scmp.lt.s32.totalorder %s19, 1
      %s216 = scalar_select %p215, %s19, 1
      %s217 = smul.addr %s216, 2
      %s218 = smul.addr %s217, 8
      %s219 = scalar_lea.vmem %s0, %s218
      %p220 = scmp.lt.s32.totalorder %s19, 1
      %s221 = scalar_select %p220, %s19, 1
      %s222 = scalar_lea.vmem %s1, %s221
      %p223 = scmp.lt.s32.totalorder %s19, 1
      %s224 = scalar_select %p223, %s19, 1
      %p225 = scmp.lt.s32.totalorder %s20, 0
      %s226 = scalar_select %p225, %s20, 0
      %s227 = sadd.s32 %s226, %s224
      %s228 = smul.addr %s227, 4
      %s229 = scalar_lea.vmem %s4, %s228
      %v230 = vld [vmem:[%s219] sm:$0xff]
      %v231 = vld [vmem:[%s219 + $0x8] sm:$0xff]
      %v232 = vld [vmem:[%s2] sm:$0xff]
      %v233 = vld [vmem:[%s2 + $0x8] sm:$0xff]
      %v234 = vld [vmem:[%s2 + $0x10] sm:$0xff]
      %v235 = vld [vmem:[%s2 + $0x18] sm:$0xff]
      %v236 = vld [vmem:[%s3] sm:$0x1]
      %v238 = vlaneseq
      %v239 = vshrl.u32 %v238, 7
      %v240 = vsub.s32 0, %v239
      %v241 = vrot.slane %v236, %v240
      %vm243 = vcmask 261120
      %v245 = vsel %vm243, %v230, 0
      %v248 = vsel %vm243, %v231, 0
      %250 = vmatprep.subr.mxu0 0.0
      %251 = vmatpush1.msra.mxu0 0.0
      %252 = vmatprep.subr.mxu0 0.0
      %253 = vmatpush1.msra.mxu0 0.0
      %254 = vmatprep.subr.mxu0 0.0
      %255 = vmatpush1.msra.mxu0 0.0
      %256 = vmatprep.subr.mxu0 0.0
      %257 = vmatpush1.msra.mxu0 0.0
      %258 = vmatprep.subr.mxu0 0.0
      %259 = vmatpush1.msra.mxu0 0.0
      %260 = vmatprep.subr.mxu0 0.0
      %261 = vmatpush1.msra.mxu0 0.0
      %262 = vmatprep.subr.mxu0 0.0
      %263 = vmatpush1.msra.mxu0 0.0
      %264 = vmatprep.subr.mxu0 0.0
      %265 = vmatpush1.msra.mxu0 0.0
      %266 = vmatprep.subr.mxu0 0.0
      %267 = vmatpush1.msra.mxu0 0.0
      %268 = vmatprep.subr.mxu0 0.0
      %269 = vmatpush1.msra.mxu0 0.0
      %270 = vmatprep.subr.mxu0 0.0
      %271 = vmatpush1.msra.mxu0 0.0
      %272 = vmatprep.subr.mxu0 0.0
      %273 = vmatpush1.msra.mxu0 0.0
      %274 = vmatprep.subr.mxu0 0.0
      %275 = vmatpush1.msra.mxu0 %v235
      %276 = vmatprep.subr.mxu0 0.0
      %277 = vmatpush1.msra.mxu0 %v234
      %278 = vmatprep.subr.mxu0 0.0
      %279 = vmatpush1.msra.mxu0 %v233
      %280 = vmatprep.subr.mxu0 0.0
      %281 = vmatpush1.msra.mxu0 %v232
      %282 = vmatprep.subr.mxu0 0.0
      %283 = vmatpush2.msra.mxu0 0.0
      %284 = vmatprep.subr.mxu0 0.0
      %285 = vmatpush2.msra.mxu0 0.0
      %286 = vmatprep.subr.mxu0 0.0
      %287 = vmatpush2.msra.mxu0 0.0
      %288 = vmatprep.subr.mxu0 0.0
      %289 = vmatpush2.msra.mxu0 0.0
      %290 = vmatprep.subr.mxu0 0.0
      %291 = vmatpush2.msra.mxu0 0.0
      %292 = vmatprep.subr.mxu0 0.0
      %293 = vmatpush2.msra.mxu0 0.0
      %294 = vmatprep.subr.mxu0 0.0
      %295 = vmatpush2.msra.mxu0 0.0
      %296 = vmatprep.subr.mxu0 0.0
      %297 = vmatpush2.msra.mxu0 0.0
      %298 = vmatprep.subr.mxu0 0.0
      %299 = vmatpush2.msra.mxu0 0.0
      %300 = vmatprep.subr.mxu0 0.0
      %301 = vmatpush2.msra.mxu0 0.0
      %302 = vmatprep.subr.mxu0 0.0
      %303 = vmatpush2.msra.mxu0 0.0
      %304 = vmatprep.subr.mxu0 0.0
      %305 = vmatpush2.msra.mxu0 0.0
      %306 = vmatprep.subr.mxu0 0.0
      %307 = vmatpush2.msra.mxu0 0.0
      %308 = vmatprep.subr.mxu0 0.0
      %309 = vmatpush2.msra.mxu0 0.0
      %310 = vmatprep.subr.mxu0 0.0
      %311 = vmatpush2.msra.mxu0 0.0
      %312 = vmatprep.subr.mxu0 0.0
      %313 = vmatpush2.msra.mxu0 0.0
      %314 = vmatprep.mubr.f32.mxu0 0.0
      %315 = vmatmul.mubr.f32.gmra.mxu0 %v245
      %v316 = vpop.f32.mrf.mxu0
      %v317 = vadd.f32 %v241, %v316
      %v318 = vpop.f32.mrf.mxu0
      %319 = vmatprep.mubr.f32.mxu0 0.0
      %320 = vmatmul.mubr.f32.gmra.mxu0 %v248
      %v321 = vpop.f32.mrf.mxu0
      %v322 = vadd.f32 %v241, %v321
      %v323 = vpop.f32.mrf.mxu0
      %324 = vdwg.mxu0
      %s325 = smul.u32 %s20, 64
      %v326 = vlaneseq
      %v327 = vshrl.u32 %v326, 7
      %v328 = vadd.s32 %v327, 8
      %v329 = vadd.s32 %v327, 16
      %v330 = vadd.s32 %v327, 24
      %v331 = vadd.s32 %v327, 32
      %v332 = vadd.s32 %v327, 40
      %v333 = vadd.s32 %v327, 48
      %v334 = vadd.s32 %v327, 56
      %v335 = vstv %s325
      %v336 = vadd.s32 %v327, %v335
      %v337 = vadd.s32 %v328, %v335
      %v338 = vadd.s32 %v329, %v335
      %v339 = vadd.s32 %v330, %v335
      %v340 = vadd.s32 %v331, %v335
      %v341 = vadd.s32 %v332, %v335
      %v342 = vadd.s32 %v333, %v335
      %v343 = vadd.s32 %v334, %v335
      %v344 = vld [vmem:[%s222] sm:$0x1]
      %v345 = vlaneseq
      %v346 = vshrl.u32 %v345, 7
      %v347 = vsub.s32 0, %v346
      %v348 = vrot.slane %v344, %v347
      %vm349 = vcmp.eq.s32.totalorder %v336, %v348
      %vm350 = vcmp.eq.s32.totalorder %v337, %v348
      %vm351 = vcmp.eq.s32.totalorder %v338, %v348
      %vm352 = vcmp.eq.s32.totalorder %v339, %v348
      %vm353 = vcmp.eq.s32.totalorder %v340, %v348
      %vm354 = vcmp.eq.s32.totalorder %v341, %v348
      %vm355 = vcmp.eq.s32.totalorder %v342, %v348
      %vm356 = vcmp.eq.s32.totalorder %v343, %v348
      %v357 = vsel %vm349, 1, 0
      %v358 = vsel %vm350, 1, 0
      %v359 = vsel %vm351, 1, 0
      %v360 = vsel %vm352, 1, 0
      %v361 = vsel %vm353, 1, 0
      %v362 = vsel %vm354, 1, 0
      %v363 = vsel %vm355, 1, 0
      %v364 = vsel %vm356, 1, 0
      %v365 = vcvt.s32.f32 %v357
      %v366 = vcvt.s32.f32 %v358
      %v367 = vcvt.s32.f32 %v359
      %v368 = vcvt.s32.f32 %v360
      %v369 = vcvt.s32.f32 %v361
      %v370 = vcvt.s32.f32 %v362
      %v371 = vcvt.s32.f32 %v363
      %v372 = vcvt.s32.f32 %v364
      %373 = vxpose.xlu0.b32.start [1/16] %v317, 128
      %374 = vxpose.xlu0.b32.cont [2/16] %v322, 128
      %375 = vxpose.xlu0.b32.cont [3/16] 0.0, 128
      %376 = vxpose.xlu0.b32.cont [4/16] 0.0, 128
      %377 = vxpose.xlu0.b32.cont [5/16] 0.0, 128
      %378 = vxpose.xlu0.b32.cont [6/16] 0.0, 128
      %379 = vxpose.xlu0.b32.cont [7/16] 0.0, 128
      %380 = vxpose.xlu0.b32.cont [8/16] 0.0, 128
      %381 = vxpose.xlu0.b32.cont [9/16] 0.0, 128
      %382 = vxpose.xlu0.b32.cont [10/16] 0.0, 128
      %383 = vxpose.xlu0.b32.cont [11/16] 0.0, 128
      %384 = vxpose.xlu0.b32.cont [12/16] 0.0, 128
      %385 = vxpose.xlu0.b32.cont [13/16] 0.0, 128
      %386 = vxpose.xlu0.b32.cont [14/16] 0.0, 128
      %387 = vxpose.xlu0.b32.cont [15/16] 0.0, 128
      %388 = vxpose.xlu0.b32.end [16/16] 0.0, 128
      %v389 = vpop.trf.xlu0
      %v390 = vpop.trf.xlu0
      %v391 = vpop.trf.xlu0
      %v392 = vpop.trf.xlu0
      %v393 = vpop.trf.xlu0
      %v394 = vpop.trf.xlu0
      %v395 = vpop.trf.xlu0
      %v396 = vpop.trf.xlu0
      %v397 = vpop.trf.xlu0
      %v398 = vpop.trf.xlu0
      %v399 = vpop.trf.xlu0
      %v400 = vpop.trf.xlu0
      %v401 = vpop.trf.xlu0
      %v402 = vpop.trf.xlu0
      %v403 = vpop.trf.xlu0
      %v404 = vpop.trf.xlu0
      %vm405 = vcmask 130048
      %v407 = vsel %vm405, %v389, 0
      %v410 = vsel %vm405, %v365, 0
      %v413 = vsel %vm405, %v366, 0
      %v416 = vsel %vm405, %v367, 0
      %v419 = vsel %vm405, %v368, 0
      %v422 = vsel %vm405, %v369, 0
      %v425 = vsel %vm405, %v370, 0
      %v428 = vsel %vm405, %v371, 0
      %v431 = vsel %vm405, %v372, 0
      %433 = vmatprep.subr.mxu0 0.0
      %434 = vmatpush1.xpose.msra.mxu0 0.0
      %435 = vmatprep.subr.mxu0 0.0
      %436 = vmatpush1.xpose.msra.mxu0 0.0
      %437 = vmatprep.subr.mxu0 0.0
      %438 = vmatpush1.xpose.msra.mxu0 0.0
      %439 = vmatprep.subr.mxu0 0.0
      %440 = vmatpush1.xpose.msra.mxu0 0.0
      %441 = vmatprep.subr.mxu0 0.0
      %442 = vmatpush1.xpose.msra.mxu0 0.0
      %443 = vmatprep.subr.mxu0 0.0
      %444 = vmatpush1.xpose.msra.mxu0 0.0
      %445 = vmatprep.subr.mxu0 0.0
      %446 = vmatpush1.xpose.msra.mxu0 0.0
      %447 = vmatprep.subr.mxu0 0.0
      %448 = vmatpush1.xpose.msra.mxu0 0.0
      %449 = vmatprep.subr.mxu0 0.0
      %450 = vmatpush1.xpose.msra.mxu0 %v431
      %451 = vmatprep.subr.mxu0 0.0
      %452 = vmatpush1.xpose.msra.mxu0 %v428
      %453 = vmatprep.subr.mxu0 0.0
      %454 = vmatpush1.xpose.msra.mxu0 %v425
      %455 = vmatprep.subr.mxu0 0.0
      %456 = vmatpush1.xpose.msra.mxu0 %v422
      %457 = vmatprep.subr.mxu0 0.0
      %458 = vmatpush1.xpose.msra.mxu0 %v419
      %459 = vmatprep.subr.mxu0 0.0
      %460 = vmatpush1.xpose.msra.mxu0 %v416
      %461 = vmatprep.subr.mxu0 0.0
      %462 = vmatpush1.xpose.msra.mxu0 %v413
      %463 = vmatprep.subr.mxu0 0.0
      %464 = vmatpush1.xpose.msra.mxu0 %v410
      %465 = vmatprep.subr.mxu0 0.0
      %466 = vmatpush2.xpose.msra.mxu0 0.0
      %467 = vmatprep.subr.mxu0 0.0
      %468 = vmatpush2.xpose.msra.mxu0 0.0
      %469 = vmatprep.subr.mxu0 0.0
      %470 = vmatpush2.xpose.msra.mxu0 0.0
      %471 = vmatprep.subr.mxu0 0.0
      %472 = vmatpush2.xpose.msra.mxu0 0.0
      %473 = vmatprep.subr.mxu0 0.0
      %474 = vmatpush2.xpose.msra.mxu0 0.0
      %475 = vmatprep.subr.mxu0 0.0
      %476 = vmatpush2.xpose.msra.mxu0 0.0
      %477 = vmatprep.subr.mxu0 0.0
      %478 = vmatpush2.xpose.msra.mxu0 0.0
      %479 = vmatprep.subr.mxu0 0.0
      %480 = vmatpush2.xpose.msra.mxu0 0.0
      %481 = vmatprep.subr.mxu0 0.0
      %482 = vmatpush2.xpose.msra.mxu0 0.0
      %483 = vmatprep.subr.mxu0 0.0
      %484 = vmatpush2.xpose.msra.mxu0 0.0
      %485 = vmatprep.subr.mxu0 0.0
      %486 = vmatpush2.xpose.msra.mxu0 0.0
      %487 = vmatprep.subr.mxu0 0.0
      %488 = vmatpush2.xpose.msra.mxu0 0.0
      %489 = vmatprep.subr.mxu0 0.0
      %490 = vmatpush2.xpose.msra.mxu0 0.0
      %491 = vmatprep.subr.mxu0 0.0
      %492 = vmatpush2.xpose.msra.mxu0 0.0
      %493 = vmatprep.subr.mxu0 0.0
      %494 = vmatpush2.xpose.msra.mxu0 0.0
      %495 = vmatprep.subr.mxu0 0.0
      %496 = vmatpush2.xpose.msra.mxu0 0.0
      %497 = vmatprep.mubr.f32.mxu0 0.0
      %498 = vmatmul.mubr.f32.gmra.mxu0 %v407
      %v499 = vpop.f32.mrf.mxu0
      %v500 = vadd.f32 0.0, %v499
      %v501 = vpop.f32.mrf.mxu0
      %502 = vdwg.mxu0
      %vm503 = vcmask 519168
      %504 = vst.msk [vmem:[%s229] sm:$0xf] %vm503, %v500
      %p505 = scmp.lt.s32.totalorder %s19, 1
      %s506 = scalar_select %p505, %s19, 1
      %p507 = scmp.lt.s32.totalorder %s20, 0
      %s508 = scalar_select %p507, %s20, 0
      %s509 = sadd.s32 %s508, %s506
      %s510 = smul.addr %s509, 4
      %s511 = scalar_lea.vmem %s4, %s510
      // Predicated region
      $region37: #{run.4} parent=35 // pred_check
        %p512 = pneg %p141
      $region38: #{run.4} parent=35 // pred_check_branch
        %514 = sbr.rel (%p512) target = $region40
      $region39: #{run.4} parent=35 // pred_region
        _
      $region40: #{run.4} parent=35 // pred_fallthru
        _
    $region36: #{run.4} parent=5 // pred_fallthru
      _
    %p515 = scmp.le.s32.totalorder 2, %s10
    // Predicated region
    $region41: #{run.4} parent=5 // pred_check
      %p516 = pneg %p515
    $region42: #{run.4} parent=5 // pred_check_branch
      %518 = sbr.rel (%p516) target = $region44
    $region43: #{run.4} parent=5 // pred_region
      %s519 = ssub.s32 %s10, 2
      // Predicated region
      $region45: #{run.4} parent=43 // pred_check
        %p520 = pneg %p147
      $region46: #{run.4} parent=43 // pred_check_branch
        %522 = sbr.rel (%p520) target = $region48
      $region47: #{run.4} parent=43 // pred_region
        %p523 = scmp.lt.s32.totalorder %s21, 1
        %s524 = scalar_select %p523, %s21, 1
        %p525 = scmp.lt.s32.totalorder %s22, 0
        %s526 = scalar_select %p525, %s22, 0
        %s527 = sadd.s32 %s526, %s524
        %s528 = smul.addr %s527, 4
        %s529 = scalar_lea.vmem %s4, %s528
      $region48: #{run.4} parent=43 // pred_fallthru
        _
    $region44: #{run.4} parent=5 // pred_fallthru
      _
  $region6: #{run.4} parent=0 // loop_footer
    %s14 = sadd.s32 1, %s10
  $region7: #{run.4} parent=0 // loop_footer_branch
    %9 = sbr.rel target = $region3
  $region8: #{run.4} parent=0 // loop_exit
    _

// kernel: run.7
$region0: #{run.7}
  #allocation0 [shape = 'u32[]', space=smem, size = 0x4, offset = 0x4, fixed_abs, tag = 'smem constant byte address 0x4 - core index']
  #allocation1 [shape = 'u32[144,128]{1,0:T(1,128)}', space=vmem, size = 0x12000, scoped, tag = 'internal scratch']
  %s0 = inlined_call_operand.vmem [shape: f32[2,16,32], index: 0, kind: input, shape index: {}]
  %s1 = inlined_call_operand.vmem [shape: f32[2,8,16], index: 1, kind: input, shape index: {}]
  %s2 = inlined_call_operand.vmem [shape: f32[2,8,16], index: 2, kind: input, shape index: {}]
  %s3 = inlined_call_operand.vmem [shape: f32[32,16], index: 3, kind: input, shape index: {}]
  %s4 = inlined_call_operand.vmem [shape: f32[1,16], index: 4, kind: input, shape index: {}]
  %s5 = inlined_call_operand.vmem [shape: f32[2,8,256], index: 5, kind: output, shape index: {}]
  %s6 = sld [smem:[#allocation0]]
  $region53: #{run.7} parent=0
    _
  %s8 = ssub.s32 1, %s6
  %s9 = scalar_select 0, %s8, %s6
  loop: start=0, step=1, limit=4
  $region2: #{run.7} parent=0 // loop_pre_header
    _
  $region3: #{run.7} parent=0 // loop_header
    %s11 = sphi 0, %s15
    %p12 = scmp.ge.s32.totalorder %s11, 4
    %s18 = sphi 0, %s30
    %s19 = sphi 0, %s26
    %s20 = sphi 0, %s18
    %s21 = sphi 0, %s19
    %s22 = sphi 0, %s20
    %s23 = sphi 0, %s21
    %s35 = sphi 0, %s37
    %s38 = sphi 0, %s35
    %s39 = sphi 0, %s38
    %s55 = sphi 0, %s39
    %s63 = sphi 0, %s65
    %s66 = sphi 0, %s63
    %s67 = sphi 0, %s66
    %s83 = sphi 0, %s67
    %s89 = sphi 0, %s91
    %s92 = sphi 0, %s89
    %s93 = sphi 0, %s92
    %s109 = sphi 0, %s93
    %s113 = sphi 0, %s113
    %s115 = sphi 0, %s113
    %s116 = sphi 0, %s115
    %s130 = sphi 0, %s116
    %s134 = sphi 0, %s134
    %s136 = sphi 0, %s134
    %s137 = sphi 0, %s136
    %s151 = sphi 0, %s137
    %s159 = sphi 0, %s161
    %s162 = sphi 0, %s159
    %s163 = sphi 0, %s162
    %s179 = sphi 0, %s163
  $region4: #{run.7} parent=0 // loop_header_branch
    %14 = sbr.rel (%p12) target = $region8
  $region5: #{run.7} parent=0 // loop_body
    %s16 = ssub.s32 %s11, 1
    %s17 = ssub.s32 %s11, 2
    %s24 = sadd.s32 1, %s19
    %p25 = scmp.ge.s32.totalorder %s24, 1
    %s26 = scalar_select %p25, 0, %s24
    %s27 = sadd.s32 1, %s18
    %s28 = scalar_select %p25, %s27, %s18
    %p29 = scmp.ge.s32.totalorder %s28, 2
    %s30 = scalar_select %p29, 0, %s28
    %s31 = ssub.s32 %s18, %s30
    %s32 = ssub.s32 %s19, %s26
    %s33 = sor.u32 %s31, %s32
    %p34 = scmp.eq.s32.totalorder %s33, 0
    %s36 = sadd.s32 %s35, 1
    %s37 = scalar_select %p34, %s35, %s36
    %p40 = pneg %p34
    %p41 = scmp.eq.s32.totalorder %s11, 1
    %p42 = por %p40, %p41
    %p43 = scmp.ne.s32.totalorder %s35, %s38
    %p44 = scmp.eq.s32.totalorder %s11, 0
    %p45 = por %p43, %p44
    %p46 = scmp.ne.s32.totalorder %s35, %s38
    %p47 = scmp.eq.s32.totalorder %s16, 1
    %p48 = por %p46, %p47
    %p49 = scmp.ne.s32.totalorder %s38, %s39
    %p50 = scmp.eq.s32.totalorder %s16, 0
    %p51 = por %p49, %p50
    %p52 = scmp.ne.s32.totalorder %s38, %s39
    %p53 = scmp.eq.s32.totalorder %s17, 1
    %p54 = por %p52, %p53
    %p56 = scmp.ne.s32.totalorder %s39, %s55
    %p57 = scmp.eq.s32.totalorder %s17, 0
    %p58 = por %p56, %p57
    %s59 = ssub.s32 %s18, %s30
    %s60 = ssub.s32 %s19, %s26
    %s61 = sor.u32 %s59, %s60
    %p62 = scmp.eq.s32.totalorder %s61, 0
    %s64 = sadd.s32 %s63, 1
    %s65 = scalar_select %p62, %s63, %s64
    %p68 = pneg %p62
    %p69 = scmp.eq.s32.totalorder %s11, 1
    %p70 = por %p68, %p69
    %p71 = scmp.ne.s32.totalorder %s63, %s66
    %p72 = scmp.eq.s32.totalorder %s11, 0
    %p73 = por %p71, %p72
    %p74 = scmp.ne.s32.totalorder %s63, %s66
    %p75 = scmp.eq.s32.totalorder %s16, 1
    %p76 = por %p74, %p75
    %p77 = scmp.ne.s32.totalorder %s66, %s67
    %p78 = scmp.eq.s32.totalorder %s16, 0
    %p79 = por %p77, %p78
    %p80 = scmp.ne.s32.totalorder %s66, %s67
    %p81 = scmp.eq.s32.totalorder %s17, 1
    %p82 = por %p80, %p81
    %p84 = scmp.ne.s32.totalorder %s67, %s83
    %p85 = scmp.eq.s32.totalorder %s17, 0
    %p86 = por %p84, %p85
    %s87 = ssub.s32 %s18, %s30
    %p88 = scmp.eq.s32.totalorder %s87, 0
    %s90 = sadd.s32 %s89, 1
    %s91 = scalar_select %p88, %s89, %s90
    %p94 = pneg %p88
    %p95 = scmp.eq.s32.totalorder %s11, 1
    %p96 = por %p94, %p95
    %p97 = scmp.ne.s32.totalorder %s89, %s92
    %p98 = scmp.eq.s32.totalorder %s11, 0
    %p99 = por %p97, %p98
    %p100 = scmp.ne.s32.totalorder %s89, %s92
    %p101 = scmp.eq.s32.totalorder %s16, 1
    %p102 = por %p100, %p101
    %p103 = scmp.ne.s32.totalorder %s92, %s93
    %p104 = scmp.eq.s32.totalorder %s16, 0
    %p105 = por %p103, %p104
    %p106 = scmp.ne.s32.totalorder %s92, %s93
    %p107 = scmp.eq.s32.totalorder %s17, 1
    %p108 = por %p106, %p107
    %p110 = scmp.ne.s32.totalorder %s93, %s109
    %p111 = scmp.eq.s32.totalorder %s17, 0
    %p112 = por %p110, %p111
    %s114 = sadd.s32 %s113, 1
    %p117 = scmp.eq.s32.totalorder %s11, 1
    %p118 = scmp.ne.s32.totalorder %s113, %s115
    %p119 = scmp.eq.s32.totalorder %s11, 0
    %p120 = por %p118, %p119
    %p121 = scmp.ne.s32.totalorder %s113, %s115
    %p122 = scmp.eq.s32.totalorder %s16, 1
    %p123 = por %p121, %p122
    %p124 = scmp.ne.s32.totalorder %s115, %s116
    %p125 = scmp.eq.s32.totalorder %s16, 0
    %p126 = por %p124, %p125
    %p127 = scmp.ne.s32.totalorder %s115, %s116
    %p128 = scmp.eq.s32.totalorder %s17, 1
    %p129 = por %p127, %p128
    %p131 = scmp.ne.s32.totalorder %s116, %s130
    %p132 = scmp.eq.s32.totalorder %s17, 0
    %p133 = por %p131, %p132
    %s135 = sadd.s32 %s134, 1
    %p138 = scmp.eq.s32.totalorder %s11, 1
    %p139 = scmp.ne.s32.totalorder %s134, %s136
    %p140 = scmp.eq.s32.totalorder %s11, 0
    %p141 = por %p139, %p140
    %p142 = scmp.ne.s32.totalorder %s134, %s136
    %p143 = scmp.eq.s32.totalorder %s16, 1
    %p144 = por %p142, %p143
    %p145 = scmp.ne.s32.totalorder %s136, %s137
    %p146 = scmp.eq.s32.totalorder %s16, 0
    %p147 = por %p145, %p146
    %p148 = scmp.ne.s32.totalorder %s136, %s137
    %p149 = scmp.eq.s32.totalorder %s17, 1
    %p150 = por %p148, %p149
    %p152 = scmp.ne.s32.totalorder %s137, %s151
    %p153 = scmp.eq.s32.totalorder %s17, 0
    %p154 = por %p152, %p153
    %s155 = ssub.s32 %s18, %s30
    %s156 = ssub.s32 %s19, %s26
    %s157 = sor.u32 %s155, %s156
    %p158 = scmp.eq.s32.totalorder %s157, 0
    %s160 = sadd.s32 %s159, 1
    %s161 = scalar_select %p158, %s159, %s160
    %p164 = pneg %p158
    %p165 = scmp.eq.s32.totalorder %s11, 1
    %p166 = por %p164, %p165
    %p167 = scmp.ne.s32.totalorder %s159, %s162
    %p168 = scmp.eq.s32.totalorder %s11, 0
    %p169 = por %p167, %p168
    %p170 = scmp.ne.s32.totalorder %s159, %s162
    %p171 = scmp.eq.s32.totalorder %s16, 1
    %p172 = por %p170, %p171
    %p173 = scmp.ne.s32.totalorder %s162, %s163
    %p174 = scmp.eq.s32.totalorder %s16, 0
    %p175 = por %p173, %p174
    %p176 = scmp.ne.s32.totalorder %s162, %s163
    %p177 = scmp.eq.s32.totalorder %s17, 1
    %p178 = por %p176, %p177
    %p180 = scmp.ne.s32.totalorder %s163, %s179
    %p181 = scmp.eq.s32.totalorder %s17, 0
    %p182 = por %p180, %p181
    %p183 = scmp.le.s32.totalorder 1, %s11
    %p184 = scmp.lt.s32.totalorder %s11, 3
    %p185 = pnand %p183, %p184
    %p186 = pneg %p185
    // Predicated region
    $region9: #{run.7} parent=5 // pred_check
      _
    $region10: #{run.7} parent=5 // pred_check_branch
      %188 = sbr.rel (%p185) target = $region12
    $region11: #{run.7} parent=5 // pred_region
      %s189 = ssub.s32 %s11, 1
      // Predicated region
      $region13: #{run.7} parent=11 // pred_check
        %p190 = pneg %p126
      $region14: #{run.7} parent=11 // pred_check_branch
        %192 = sbr.rel (%p190) target = $region16
      $region15: #{run.7} parent=11 // pred_region
        _
      $region16: #{run.7} parent=11 // pred_fallthru
        _
      // Predicated region
      $region17: #{run.7} parent=11 // pred_check
        %p193 = pneg %p147
      $region18: #{run.7} parent=11 // pred_check_branch
        %195 = sbr.rel (%p193) target = $region20
      $region19: #{run.7} parent=11 // pred_region
        _
      $region20: #{run.7} parent=11 // pred_fallthru
        _
    $region12: #{run.7} parent=5 // pred_fallthru
      _
    %p196 = scmp.lt.s32.totalorder %s11, 2
    // Predicated region
    $region21: #{run.7} parent=5 // pred_check
      %p197 = pneg %p196
    $region22: #{run.7} parent=5 // pred_check_branch
      %199 = sbr.rel (%p197) target = $region24
    $region23: #{run.7} parent=5 // pred_region
      // Predicated region
      $region25: #{run.7} parent=23 // pred_check
        %p200 = pneg %p45
      $region26: #{run.7} parent=23 // pred_check_branch
        %202 = sbr.rel (%p200) target = $region28
      $region27: #{run.7} parent=23 // pred_region
        %s203 = smul.u32 2, %s19
        %p204 = scmp.lt.s32.totalorder %s18, 1
        %s205 = scalar_select %p204, %s18, 1
        %p206 = scmp.lt.s32.totalorder %s203, 1
        %s207 = scalar_select %p206, %s203, 1
        %s208 = smul.addr %s205, 2
        %s209 = sadd.s32 %s207, %s208
        %s210 = smul.addr %s209, 8
        %s211 = scalar_lea.vmem %s0, %s210
        %s212 = smul.u32 2, %s19
      $region28: #{run.7} parent=23 // pred_fallthru
        _
      // Predicated region
      $region29: #{run.7} parent=23 // pred_check
        %p213 = pneg %p73
      $region30: #{run.7} parent=23 // pred_check_branch
        %215 = sbr.rel (%p213) target = $region32
      $region31: #{run.7} parent=23 // pred_region
        %p216 = scmp.lt.s32.totalorder %s18, 1
        %s217 = scalar_select %p216, %s18, 1
        %p218 = scmp.lt.s32.totalorder %s19, 0
        %s219 = scalar_select %p218, %s19, 0
        %s220 = sadd.s32 %s219, %s217
        %s221 = smul.addr %s220, 8
        %s222 = scalar_lea.vmem %s1, %s221
      $region32: #{run.7} parent=23 // pred_fallthru
        _
      // Predicated region
      $region33: #{run.7} parent=23 // pred_check
        %p223 = pneg %p99
      $region34: #{run.7} parent=23 // pred_check_branch
        %225 = sbr.rel (%p223) target = $region36
      $region35: #{run.7} parent=23 // pred_region
        %p226 = scmp.lt.s32.totalorder %s18, 1
        %s227 = scalar_select %p226, %s18, 1
        %s228 = smul.addr %s227, 8
        %s229 = scalar_lea.vmem %s2, %s228
      $region36: #{run.7} parent=23 // pred_fallthru
        _
    $region24: #{run.7} parent=5 // pred_fallthru
      _
    %p230 = scmp.le.s32.totalorder 1, %s11
    %p231 = scmp.lt.s32.totalorder %s11, 3
    %p232 = pnand %p230, %p231
    %p233 = pneg %p232
    // Predicated region
    $region37: #{run.7} parent=5 // pred_check
      _
    $region38: #{run.7} parent=5 // pred_check_branch
      %235 = sbr.rel (%p232) target = $region40
    $region39: #{run.7} parent=5 // pred_region
      %s236 = ssub.s32 %s11, 1
      %s237 = smul.u32 2, %s21
      %p238 = scmp.lt.s32.totalorder %s20, 1
      %s239 = scalar_select %p238, %s20, 1
      %p240 = scmp.lt.s32.totalorder %s237, 1
      %s241 = scalar_select %p240, %s237, 1
      %s242 = smul.addr %s239, 2
      %s243 = sadd.s32 %s241, %s242
      %s244 = smul.addr %s243, 8
      %s245 = scalar_lea.vmem %s0, %s244
      %p246 = pneg %p51
      %p247 = pneg %p48
      %p248 = scmp.lt.s32.totalorder %s20, 1
      %s249 = scalar_select %p248, %s20, 1
      %p250 = scmp.lt.s32.totalorder %s21, 0
      %s251 = scalar_select %p250, %s21, 0
      %s252 = sadd.s32 %s251, %s249
      %s253 = smul.addr %s252, 8
      %s254 = scalar_lea.vmem %s1, %s253
      %p255 = pneg %p79
      %p256 = pneg %p76
      %p257 = scmp.lt.s32.totalorder %s20, 1
      %s258 = scalar_select %p257, %s20, 1
      %s259 = smul.addr %s258, 8
      %s260 = scalar_lea.vmem %s2, %s259
      %p261 = pneg %p105
      %p262 = pneg %p102
      %p263 = pneg %p126
      %p264 = pneg %p123
      %p265 = pneg %p147
      %p266 = pneg %p144
      %p267 = pneg %p175
      %p268 = pneg %p172
      %s269 = smul.u32 2, %s21
      %p270 = scmp.lt.s32.totalorder %s20, 1
      %s271 = scalar_select %p270, %s20, 1
      %p272 = scmp.lt.s32.totalorder %s269, 1
      %s273 = scalar_select %p272, %s269, 1
      %s274 = smul.addr %s271, 2
      %s275 = sadd.s32 %s273, %s274
      %s276 = smul.addr %s275, 8
      %s277 = scalar_lea.vmem %s5, %s276
      %s278 = smul.u32 2, %s21
      %p279 = scmp.lt.s32.totalorder %s20, 1
      %s280 = scalar_select %p279, %s20, 1
      %p281 = scmp.lt.s32.totalorder %s278, 1
      %s282 = scalar_select %p281, %s278, 1
      %s283 = smul.addr %s280, 2
      %s284 = sadd.s32 %s282, %s283
      %s285 = smul.addr %s284, 8
      %s286 = scalar_lea.vmem %s0, %s285
      %s287 = smul.u32 2, %s21
      %p288 = scmp.lt.s32.totalorder %s20, 1
      %s289 = scalar_select %p288, %s20, 1
      %p290 = scmp.lt.s32.totalorder %s21, 0
      %s291 = scalar_select %p290, %s21, 0
      %s292 = sadd.s32 %s291, %s289
      %s293 = smul.addr %s292, 8
      %s294 = scalar_lea.vmem %s1, %s293
      %p295 = scmp.lt.s32.totalorder %s20, 1
      %s296 = scalar_select %p295, %s20, 1
      %s297 = smul.addr %s296, 8
      %s298 = scalar_lea.vmem %s2, %s297
      %s299 = smul.u32 2, %s21
      %p300 = scmp.lt.s32.totalorder %s20, 1
      %s301 = scalar_select %p300, %s20, 1
      %p302 = scmp.lt.s32.totalorder %s299, 1
      %s303 = scalar_select %p302, %s299, 1
      %s304 = smul.addr %s301, 2
      %s305 = sadd.s32 %s303, %s304
      %s306 = smul.addr %s305, 8
      %s307 = scalar_lea.vmem %s5, %s306
      %s308 = smul.u32 2, %s21
      %v309 = vld [vmem:[%s286] sm:$0xff]
      %v310 = vld [vmem:[%s286 + $0x8] sm:$0xff]
      %v311 = vld [vmem:[%s3] sm:$0xff]
      %v312 = vld [vmem:[%s3 + $0x8] sm:$0xff]
      %v313 = vld [vmem:[%s3 + $0x10] sm:$0xff]
      %v314 = vld [vmem:[%s3 + $0x18] sm:$0xff]
      %v315 = vld [vmem:[%s4] sm:$0x1]
      %v317 = vlaneseq
      %v318 = vshrl.u32 %v317, 7
      %v319 = vsub.s32 0, %v318
      %v320 = vrot.slane %v315, %v319
      %vm322 = vcmask 261120
      %v324 = vsel %vm322, %v309, 0
      %v327 = vsel %vm322, %v310, 0
      %329 = vmatprep.subr.mxu0 0.0
      %330 = vmatpush1.msra.mxu0 0.0
      %331 = vmatprep.subr.mxu0 0.0
      %332 = vmatpush1.msra.mxu0 0.0
      %333 = vmatprep.subr.mxu0 0.0
      %334 = vmatpush1.msra.mxu0 0.0
      %335 = vmatprep.subr.mxu0 0.0
      %336 = vmatpush1.msra.mxu0 0.0
      %337 = vmatprep.subr.mxu0 0.0
      %338 = vmatpush1.msra.mxu0 0.0
      %339 = vmatprep.subr.mxu0 0.0
      %340 = vmatpush1.msra.mxu0 0.0
      %341 = vmatprep.subr.mxu0 0.0
      %342 = vmatpush1.msra.mxu0 0.0
      %343 = vmatprep.subr.mxu0 0.0
      %344 = vmatpush1.msra.mxu0 0.0
      %345 = vmatprep.subr.mxu0 0.0
      %346 = vmatpush1.msra.mxu0 0.0
      %347 = vmatprep.subr.mxu0 0.0
      %348 = vmatpush1.msra.mxu0 0.0
      %349 = vmatprep.subr.mxu0 0.0
      %350 = vmatpush1.msra.mxu0 0.0
      %351 = vmatprep.subr.mxu0 0.0
      %352 = vmatpush1.msra.mxu0 0.0
      %353 = vmatprep.subr.mxu0 0.0
      %354 = vmatpush1.msra.mxu0 %v314
      %355 = vmatprep.subr.mxu0 0.0
      %356 = vmatpush1.msra.mxu0 %v313
      %357 = vmatprep.subr.mxu0 0.0
      %358 = vmatpush1.msra.mxu0 %v312
      %359 = vmatprep.subr.mxu0 0.0
      %360 = vmatpush1.msra.mxu0 %v311
      %361 = vmatprep.subr.mxu0 0.0
      %362 = vmatpush2.msra.mxu0 0.0
      %363 = vmatprep.subr.mxu0 0.0
      %364 = vmatpush2.msra.mxu0 0.0
      %365 = vmatprep.subr.mxu0 0.0
      %366 = vmatpush2.msra.mxu0 0.0
      %367 = vmatprep.subr.mxu0 0.0
      %368 = vmatpush2.msra.mxu0 0.0
      %369 = vmatprep.subr.mxu0 0.0
      %370 = vmatpush2.msra.mxu0 0.0
      %371 = vmatprep.subr.mxu0 0.0
      %372 = vmatpush2.msra.mxu0 0.0
      %373 = vmatprep.subr.mxu0 0.0
      %374 = vmatpush2.msra.mxu0 0.0
      %375 = vmatprep.subr.mxu0 0.0
      %376 = vmatpush2.msra.mxu0 0.0
      %377 = vmatprep.subr.mxu0 0.0
      %378 = vmatpush2.msra.mxu0 0.0
      %379 = vmatprep.subr.mxu0 0.0
      %380 = vmatpush2.msra.mxu0 0.0
      %381 = vmatprep.subr.mxu0 0.0
      %382 = vmatpush2.msra.mxu0 0.0
      %383 = vmatprep.subr.mxu0 0.0
      %384 = vmatpush2.msra.mxu0 0.0
      %385 = vmatprep.subr.mxu0 0.0
      %386 = vmatpush2.msra.mxu0 0.0
      %387 = vmatprep.subr.mxu0 0.0
      %388 = vmatpush2.msra.mxu0 0.0
      %389 = vmatprep.subr.mxu0 0.0
      %390 = vmatpush2.msra.mxu0 0.0
      %391 = vmatprep.subr.mxu0 0.0
      %392 = vmatpush2.msra.mxu0 0.0
      %393 = vmatprep.mubr.f32.mxu0 0.0
      %394 = vmatmul.mubr.f32.gmra.mxu0 %v324
      %v395 = vpop.f32.mrf.mxu0
      %v396 = vadd.f32 %v320, %v395
      %v397 = vpop.f32.mrf.mxu0
      %398 = vmatprep.mubr.f32.mxu0 0.0
      %399 = vmatmul.mubr.f32.gmra.mxu0 %v327
      %v400 = vpop.f32.mrf.mxu0
      %v401 = vadd.f32 %v320, %v400
      %v402 = vpop.f32.mrf.mxu0
      %403 = vdwg.mxu0
      %v404 = vld [vmem:[%s294] sm:$0xff]
      %v405 = vlaneseq
      %v406 = vshrl.u32 %v405, 7
      %v407 = vsub.s32 0, %v406
      %v408 = vrot.slane %v404, %v407
      %410 = vbcast.lane.b32.xlu0 %v408, 256
      %v411 = vpop.permute.xlu0 %410
      %s413 = sor.u32 256, 8
      %414 = vbcast.lane.b32.xlu0 %v408, %s413
      %v415 = vpop.permute.xlu0 %414
      %v416 = vlaneseq
      %v417 = vshrl.u32 %v416, 7
      %v418 = vsub.s32 1, %v417
      %v419 = vrot.slane %v404, %v418
      %421 = vbcast.lane.b32.xlu0 %v419, 256
      %v422 = vpop.permute.xlu0 %421
      %s424 = sor.u32 256, 8
      %425 = vbcast.lane.b32.xlu0 %v419, %s424
      %v426 = vpop.permute.xlu0 %425
      %v427 = vlaneseq
      %v428 = vshrl.u32 %v427, 7
      %v429 = vsub.s32 2, %v428
      %v430 = vrot.slane %v404, %v429
      %432 = vbcast.lane.b32.xlu0 %v430, 256
      %v433 = vpop.permute.xlu0 %432
      %s435 = sor.u32 256, 8
      %436 = vbcast.lane.b32.xlu0 %v430, %s435
      %v437 = vpop.permute.xlu0 %436
      %v438 = vlaneseq
      %v439 = vshrl.u32 %v438, 7
      %v440 = vsub.s32 3, %v439
      %v441 = vrot.slane %v404, %v440
      %443 = vbcast.lane.b32.xlu0 %v441, 256
      %v444 = vpop.permute.xlu0 %443
      %s446 = sor.u32 256, 8
      %447 = vbcast.lane.b32.xlu0 %v441, %s446
      %v448 = vpop.permute.xlu0 %447
      %v449 = vlaneseq
      %v450 = vshrl.u32 %v449, 7
      %v451 = vsub.s32 4, %v450
      %v452 = vrot.slane %v404, %v451
      %454 = vbcast.lane.b32.xlu0 %v452, 256
      %v455 = vpop.permute.xlu0 %454
      %s457 = sor.u32 256, 8
      %458 = vbcast.lane.b32.xlu0 %v452, %s457
      %v459 = vpop.permute.xlu0 %458
      %v460 = vlaneseq
      %v461 = vshrl.u32 %v460, 7
      %v462 = vsub.s32 5, %v461
      %v463 = vrot.slane %v404, %v462
      %465 = vbcast.lane.b32.xlu0 %v463, 256
      %v466 = vpop.permute.xlu0 %465
      %s468 = sor.u32 256, 8
      %469 = vbcast.lane.b32.xlu0 %v463, %s468
      %v470 = vpop.permute.xlu0 %469
      %v471 = vlaneseq
      %v472 = vshrl.u32 %v471, 7
      %v473 = vsub.s32 6, %v472
      %v474 = vrot.slane %v404, %v473
      %476 = vbcast.lane.b32.xlu0 %v474, 256
      %v477 = vpop.permute.xlu0 %476
      %s479 = sor.u32 256, 8
      %480 = vbcast.lane.b32.xlu0 %v474, %s479
      %v481 = vpop.permute.xlu0 %480
      %v482 = vlaneseq
      %v483 = vshrl.u32 %v482, 7
      %v484 = vsub.s32 7, %v483
      %v485 = vrot.slane %v404, %v484
      %487 = vbcast.lane.b32.xlu0 %v485, 256
      %v488 = vpop.permute.xlu0 %487
      %s490 = sor.u32 256, 8
      %491 = vbcast.lane.b32.xlu0 %v485, %s490
      %v492 = vpop.permute.xlu0 %491
      %v493 = vmul.f32 %v411, %v396
      %v494 = vmul.f32 %v415, %v401
      %v495 = vmul.f32 %v422, %v396
      %v496 = vmul.f32 %v426, %v401
      %v497 = vmul.f32 %v433, %v396
      %v498 = vmul.f32 %v437, %v401
      %v499 = vmul.f32 %v444, %v396
      %v500 = vmul.f32 %v448, %v401
      %v501 = vmul.f32 %v455, %v396
      %v502 = vmul.f32 %v459, %v401
      %v503 = vmul.f32 %v466, %v396
      %v504 = vmul.f32 %v470, %v401
      %v505 = vmul.f32 %v477, %v396
      %v506 = vmul.f32 %v481, %v401
      %v507 = vmul.f32 %v488, %v396
      %v508 = vmul.f32 %v492, %v401
      %v509 = vld [vmem:[%s298] sm:$0xff]
      %v511 = vcombine.high %v509, %v509
      %v513 = vunpack.c.l.s4 1966171168
      %v514 = vunpack.c.0.s8 %v513
      %v515 = vlaneseq
      %v516 = vshrl.u32 %v515, 7
      %v517 = vsub.s32 %v514, %v516
      %v518 = vrot.slane %v509, %v517
      %v520 = vunpack.c.l.s4 1966171168
      %v521 = vunpack.c.0.s8 %v520
      %v522 = vlaneseq
      %v523 = vshrl.u32 %v522, 7
      %v524 = vsub.s32 %v521, %v523
      %v525 = vrot.slane %v511, %v524
      %v526 = vcombine.high %v518, %v518
      %v527 = vcombine.high %v525, %v525
      %v529 = vunpack.c.l.s4 1966171168
      %v530 = vunpack.c.0.s8 %v529
      %v531 = vlaneseq
      %v532 = vshrl.u32 %v531, 7
      %v533 = vsub.s32 %v530, %v532
      %v534 = vrot.slane %v518, %v533
      %v536 = vunpack.c.l.s4 1966171168
      %v537 = vunpack.c.0.s8 %v536
      %v538 = vlaneseq
      %v539 = vshrl.u32 %v538, 7
      %v540 = vsub.s32 %v537, %v539
      %v541 = vrot.slane %v525, %v540
      %v543 = vunpack.c.l.s4 1966171168
      %v544 = vunpack.c.0.s8 %v543
      %v545 = vlaneseq
      %v546 = vshrl.u32 %v545, 7
      %v547 = vsub.s32 %v544, %v546
      %v548 = vrot.slane %v526, %v547
      %v550 = vunpack.c.l.s4 1966171168
      %v551 = vunpack.c.0.s8 %v550
      %v552 = vlaneseq
      %v553 = vshrl.u32 %v552, 7
      %v554 = vsub.s32 %v551, %v553
      %v555 = vrot.slane %v527, %v554
      %v556 = vcombine.high %v534, %v534
      %v557 = vcombine.high %v541, %v541
      %v558 = vcombine.high %v548, %v548
      %v559 = vcombine.high %v555, %v555
      %v560 = vlaneseq
      %v561 = vshrl.u32 %v560, 7
      %v562 = vsub.s32 0, %v561
      %v563 = vrot.slane %v534, %v562
      %v564 = vlaneseq
      %v565 = vshrl.u32 %v564, 7
      %v566 = vsub.s32 0, %v565
      %v567 = vrot.slane %v548, %v566
      %v568 = vlaneseq
      %v569 = vshrl.u32 %v568, 7
      %v570 = vsub.s32 0, %v569
      %v571 = vrot.slane %v556, %v570
      %v572 = vlaneseq
      %v573 = vshrl.u32 %v572, 7
      %v574 = vsub.s32 0, %v573
      %v575 = vrot.slane %v558, %v574
      %v576 = vlaneseq
      %v577 = vshrl.u32 %v576, 7
      %v578 = vsub.s32 0, %v577
      %v579 = vrot.slane %v541, %v578
      %v580 = vlaneseq
      %v581 = vshrl.u32 %v580, 7
      %v582 = vsub.s32 0, %v581
      %v583 = vrot.slane %v555, %v582
      %v584 = vlaneseq
      %v585 = vshrl.u32 %v584, 7
      %v586 = vsub.s32 0, %v585
      %v587 = vrot.slane %v557, %v586
      %v588 = vlaneseq
      %v589 = vshrl.u32 %v588, 7
      %v590 = vsub.s32 0, %v589
      %v591 = vrot.slane %v559, %v590
      %v600 = vadd.f32 %v493, %v563
      %v601 = vadd.f32 %v494, %v563
      %v602 = vadd.f32 %v495, %v567
      %v603 = vadd.f32 %v496, %v567
      %v604 = vadd.f32 %v497, %v571
      %v605 = vadd.f32 %v498, %v571
      %v606 = vadd.f32 %v499, %v575
      %v607 = vadd.f32 %v500, %v575
      %v608 = vadd.f32 %v501, %v579
      %v609 = vadd.f32 %v502, %v579
      %v610 = vadd.f32 %v503, %v583
      %v611 = vadd.f32 %v504, %v583
      %v612 = vadd.f32 %v505, %v587
      %v613 = vadd.f32 %v506, %v587
      %v614 = vadd.f32 %v507, %v591
      %v615 = vadd.f32 %v508, %v591
      %v616 = vcombine.low %v600, %v604
      %v617 = vcombine.high %v600, %v604
      %v619 = vunpack.c.l.s4 1983009808
      %v620 = vunpack.c.0.s8 %v619
      %v621 = vlaneseq
      %v622 = vshrl.u32 %v621, 7
      %v623 = vsub.s32 %v620, %v622
      %v624 = vrot.slane %v616, %v623
      %v626 = vunpack.c.l.s4 1983009808
      %v627 = vunpack.c.0.s8 %v626
      %v628 = vlaneseq
      %v629 = vshrl.u32 %v628, 7
      %v630 = vsub.s32 %v627, %v629
      %v631 = vrot.slane %v617, %v630
      %v632 = vcombine.low %v602, %v606
      %v633 = vcombine.high %v602, %v606
      %v635 = vunpack.c.l.s4 1983009808
      %v636 = vunpack.c.0.s8 %v635
      %v637 = vlaneseq
      %v638 = vshrl.u32 %v637, 7
      %v639 = vsub.s32 %v636, %v638
      %v640 = vrot.slane %v632, %v639
      %v642 = vunpack.c.l.s4 1983009808
      %v643 = vunpack.c.0.s8 %v642
      %v644 = vlaneseq
      %v645 = vshrl.u32 %v644, 7
      %v646 = vsub.s32 %v643, %v645
      %v647 = vrot.slane %v633, %v646
      %v648 = vcombine.low %v608, %v612
      %v649 = vcombine.high %v608, %v612
      %v651 = vunpack.c.l.s4 1983009808
      %v652 = vunpack.c.0.s8 %v651
      %v653 = vlaneseq
      %v654 = vshrl.u32 %v653, 7
      %v655 = vsub.s32 %v652, %v654
      %v656 = vrot.slane %v648, %v655
      %v658 = vunpack.c.l.s4 1983009808
      %v659 = vunpack.c.0.s8 %v658
      %v660 = vlaneseq
      %v661 = vshrl.u32 %v660, 7
      %v662 = vsub.s32 %v659, %v661
      %v663 = vrot.slane %v649, %v662
      %v664 = vcombine.low %v610, %v614
      %v665 = vcombine.high %v610, %v614
      %v667 = vunpack.c.l.s4 1983009808
      %v668 = vunpack.c.0.s8 %v667
      %v669 = vlaneseq
      %v670 = vshrl.u32 %v669, 7
      %v671 = vsub.s32 %v668, %v670
      %v672 = vrot.slane %v664, %v671
      %v674 = vunpack.c.l.s4 1983009808
      %v675 = vunpack.c.0.s8 %v674
      %v676 = vlaneseq
      %v677 = vshrl.u32 %v676, 7
      %v678 = vsub.s32 %v675, %v677
      %v679 = vrot.slane %v665, %v678
      %v680 = vcombine.low %v624, %v640
      %v681 = vcombine.high %v624, %v640
      %v683 = vunpack.c.l.s4 1934713408
      %v684 = vunpack.c.0.s8 %v683
      %v685 = vlaneseq
      %v686 = vshrl.u32 %v685, 7
      %v687 = vsub.s32 %v684, %v686
      %v688 = vrot.slane %v680, %v687
      %v690 = vunpack.c.l.s4 1934713408
      %v691 = vunpack.c.0.s8 %v690
      %v692 = vlaneseq
      %v693 = vshrl.u32 %v692, 7
      %v694 = vsub.s32 %v691, %v693
      %v695 = vrot.slane %v681, %v694
      %v696 = vcombine.low %v631, %v647
      %v697 = vcombine.high %v631, %v647
      %v699 = vunpack.c.l.s4 1934713408
      %v700 = vunpack.c.0.s8 %v699
      %v701 = vlaneseq
      %v702 = vshrl.u32 %v701, 7
      %v703 = vsub.s32 %v700, %v702
      %v704 = vrot.slane %v696, %v703
      %v706 = vunpack.c.l.s4 1934713408
      %v707 = vunpack.c.0.s8 %v706
      %v708 = vlaneseq
      %v709 = vshrl.u32 %v708, 7
      %v710 = vsub.s32 %v707, %v709
      %v711 = vrot.slane %v697, %v710
      %v712 = vcombine.low %v656, %v672
      %v713 = vcombine.high %v656, %v672
      %v715 = vunpack.c.l.s4 1934713408
      %v716 = vunpack.c.0.s8 %v715
      %v717 = vlaneseq
      %v718 = vshrl.u32 %v717, 7
      %v719 = vsub.s32 %v716, %v718
      %v720 = vrot.slane %v712, %v719
      %v722 = vunpack.c.l.s4 1934713408
      %v723 = vunpack.c.0.s8 %v722
      %v724 = vlaneseq
      %v725 = vshrl.u32 %v724, 7
      %v726 = vsub.s32 %v723, %v725
      %v727 = vrot.slane %v713, %v726
      %v728 = vcombine.low %v663, %v679
      %v729 = vcombine.high %v663, %v679
      %v731 = vunpack.c.l.s4 1934713408
      %v732 = vunpack.c.0.s8 %v731
      %v733 = vlaneseq
      %v734 = vshrl.u32 %v733, 7
      %v735 = vsub.s32 %v732, %v734
      %v736 = vrot.slane %v728, %v735
      %v738 = vunpack.c.l.s4 1934713408
      %v739 = vunpack.c.0.s8 %v738
      %v740 = vlaneseq
      %v741 = vshrl.u32 %v740, 7
      %v742 = vsub.s32 %v739, %v741
      %v743 = vrot.slane %v729, %v742
      %v744 = vcombine.low %v688, %v720
      %v745 = vcombine.high %v688, %v720
      %v746 = vcombine.low %v695, %v727
      %v747 = vcombine.high %v695, %v727
      %v748 = vcombine.low %v704, %v736
      %v749 = vcombine.high %v704, %v736
      %v750 = vcombine.low %v711, %v743
      %v751 = vcombine.high %v711, %v743
      %v752 = vcombine.low %v601, %v605
      %v753 = vcombine.high %v601, %v605
      %v755 = vunpack.c.l.s4 1983009808
      %v756 = vunpack.c.0.s8 %v755
      %v757 = vlaneseq
      %v758 = vshrl.u32 %v757, 7
      %v759 = vsub.s32 %v756, %v758
      %v760 = vrot.slane %v752, %v759
      %v762 = vunpack.c.l.s4 1983009808
      %v763 = vunpack.c.0.s8 %v762
      %v764 = vlaneseq
      %v765 = vshrl.u32 %v764, 7
      %v766 = vsub.s32 %v763, %v765
      %v767 = vrot.slane %v753, %v766
      %v768 = vcombine.low %v603, %v607
      %v769 = vcombine.high %v603, %v607
      %v771 = vunpack.c.l.s4 1983009808
      %v772 = vunpack.c.0.s8 %v771
      %v773 = vlaneseq
      %v774 = vshrl.u32 %v773, 7
      %v775 = vsub.s32 %v772, %v774
      %v776 = vrot.slane %v768, %v775
      %v778 = vunpack.c.l.s4 1983009808
      %v779 = vunpack.c.0.s8 %v778
      %v780 = vlaneseq
      %v781 = vshrl.u32 %v780, 7
      %v782 = vsub.s32 %v779, %v781
      %v783 = vrot.slane %v769, %v782
      %v784 = vcombine.low %v609, %v613
      %v785 = vcombine.high %v609, %v613
      %v787 = vunpack.c.l.s4 1983009808
      %v788 = vunpack.c.0.s8 %v787
      %v789 = vlaneseq
      %v790 = vshrl.u32 %v789, 7
      %v791 = vsub.s32 %v788, %v790
      %v792 = vrot.slane %v784, %v791
      %v794 = vunpack.c.l.s4 1983009808
      %v795 = vunpack.c.0.s8 %v794
      %v796 = vlaneseq
      %v797 = vshrl.u32 %v796, 7
      %v798 = vsub.s32 %v795, %v797
      %v799 = vrot.slane %v785, %v798
      %v800 = vcombine.low %v611, %v615
      %v801 = vcombine.high %v611, %v615
      %v803 = vunpack.c.l.s4 1983009808
      %v804 = vunpack.c.0.s8 %v803
      %v805 = vlaneseq
      %v806 = vshrl.u32 %v805, 7
      %v807 = vsub.s32 %v804, %v806
      %v808 = vrot.slane %v800, %v807
      %v810 = vunpack.c.l.s4 1983009808
      %v811 = vunpack.c.0.s8 %v810
      %v812 = vlaneseq
      %v813 = vshrl.u32 %v812, 7
      %v814 = vsub.s32 %v811, %v813
      %v815 = vrot.slane %v801, %v814
      %v816 = vcombine.low %v760, %v776
      %v817 = vcombine.high %v760, %v776
      %v819 = vunpack.c.l.s4 1934713408
      %v820 = vunpack.c.0.s8 %v819
      %v821 = vlaneseq
      %v822 = vshrl.u32 %v821, 7
      %v823 = vsub.s32 %v820, %v822
      %v824 = vrot.slane %v816, %v823
      %v826 = vunpack.c.l.s4 1934713408
      %v827 = vunpack.c.0.s8 %v826
      %v828 = vlaneseq
      %v829 = vshrl.u32 %v828, 7
      %v830 = vsub.s32 %v827, %v829
      %v831 = vrot.slane %v817, %v830
      %v832 = vcombine.low %v767, %v783
      %v833 = vcombine.high %v767, %v783
      %v835 = vunpack.c.l.s4 1934713408
      %v836 = vunpack.c.0.s8 %v835
      %v837 = vlaneseq
      %v838 = vshrl.u32 %v837, 7
      %v839 = vsub.s32 %v836, %v838
      %v840 = vrot.slane %v832, %v839
      %v842 = vunpack.c.l.s4 1934713408
      %v843 = vunpack.c.0.s8 %v842
      %v844 = vlaneseq
      %v845 = vshrl.u32 %v844, 7
      %v846 = vsub.s32 %v843, %v845
      %v847 = vrot.slane %v833, %v846
      %v848 = vcombine.low %v792, %v808
      %v849 = vcombine.high %v792, %v808
      %v851 = vunpack.c.l.s4 1934713408
      %v852 = vunpack.c.0.s8 %v851
      %v853 = vlaneseq
      %v854 = vshrl.u32 %v853, 7
      %v855 = vsub.s32 %v852, %v854
      %v856 = vrot.slane %v848, %v855
      %v858 = vunpack.c.l.s4 1934713408
      %v859 = vunpack.c.0.s8 %v858
      %v860 = vlaneseq
      %v861 = vshrl.u32 %v860, 7
      %v862 = vsub.s32 %v859, %v861
      %v863 = vrot.slane %v849, %v862
      %v864 = vcombine.low %v799, %v815
      %v865 = vcombine.high %v799, %v815
      %v867 = vunpack.c.l.s4 1934713408
      %v868 = vunpack.c.0.s8 %v867
      %v869 = vlaneseq
      %v870 = vshrl.u32 %v869, 7
      %v871 = vsub.s32 %v868, %v870
      %v872 = vrot.slane %v864, %v871
      %v874 = vunpack.c.l.s4 1934713408
      %v875 = vunpack.c.0.s8 %v874
      %v876 = vlaneseq
      %v877 = vshrl.u32 %v876, 7
      %v878 = vsub.s32 %v875, %v877
      %v879 = vrot.slane %v865, %v878
      %v880 = vcombine.low %v824, %v856
      %v881 = vcombine.high %v824, %v856
      %v882 = vcombine.low %v831, %v863
      %v883 = vcombine.high %v831, %v863
      %v884 = vcombine.low %v840, %v872
      %v885 = vcombine.high %v840, %v872
      %v886 = vcombine.low %v847, %v879
      %v887 = vcombine.high %v847, %v879
      %889 = vrot.lane.b32.xlu0 %v745, 16
      %v890 = vpop.permute.xlu0 %889
      %893 = vrot.lane.b32.xlu0 %v746, 32
      %v894 = vpop.permute.xlu0 %893
      %897 = vrot.lane.b32.xlu0 %v747, 48
      %v898 = vpop.permute.xlu0 %897
      %901 = vrot.lane.b32.xlu0 %v748, 64
      %v902 = vpop.permute.xlu0 %901
      %905 = vrot.lane.b32.xlu0 %v749, 80
      %v906 = vpop.permute.xlu0 %905
      %909 = vrot.lane.b32.xlu0 %v750, 96
      %v910 = vpop.permute.xlu0 %909
      %913 = vrot.lane.b32.xlu0 %v751, 112
      %v914 = vpop.permute.xlu0 %913
      %917 = vrot.lane.b32.xlu0 %v881, 16
      %v918 = vpop.permute.xlu0 %917
      %921 = vrot.lane.b32.xlu0 %v882, 32
      %v922 = vpop.permute.xlu0 %921
      %925 = vrot.lane.b32.xlu0 %v883, 48
      %v926 = vpop.permute.xlu0 %925
      %929 = vrot.lane.b32.xlu0 %v884, 64
      %v930 = vpop.permute.xlu0 %929
      %933 = vrot.lane.b32.xlu0 %v885, 80
      %v934 = vpop.permute.xlu0 %933
      %937 = vrot.lane.b32.xlu0 %v886, 96
      %v938 = vpop.permute.xlu0 %937
      %941 = vrot.lane.b32.xlu0 %v887, 112
      %v942 = vpop.permute.xlu0 %941
      %vm944 = vcmask 130048
      %v945 = vsel %vm944, %v744, %v890
      %v946 = vsel %vm322, %v945, %v894
      %vm947 = vcmask 392192
      %v948 = vsel %vm947, %v946, %v898
      %vm949 = vcmask 523264
      %v950 = vsel %vm949, %v948, %v902
      %vm951 = vcmask 654336
      %v952 = vsel %vm951, %v950, %v906
      %vm953 = vcmask 785408
      %v954 = vsel %vm953, %v952, %v910
      %vm955 = vcmask 916480
      %v956 = vsel %vm955, %v954, %v914
      %v957 = vsel %vm944, %v880, %v918
      %v958 = vsel %vm322, %v957, %v922
      %v959 = vsel %vm947, %v958, %v926
      %v960 = vsel %vm949, %v959, %v930
      %v961 = vsel %vm951, %v960, %v934
      %v962 = vsel %vm953, %v961, %v938
      %v963 = vsel %vm955, %v962, %v942
      %964 = vst [vmem:[%s307] sm:$0xff] %v956
      %965 = vst [vmem:[%s307 + $0x8] sm:$0xff] %v963
      %s966 = smul.u32 2, %s21
      %p967 = scmp.lt.s32.totalorder %s20, 1
      %s968 = scalar_select %p967, %s20, 1
      %p969 = scmp.lt.s32.totalorder %s966, 1
      %s970 = scalar_select %p969, %s966, 1
      %s971 = smul.addr %s968, 2
      %s972 = sadd.s32 %s970, %s971
      %s973 = smul.addr %s972, 8
      %s974 = scalar_lea.vmem %s5, %s973
      // Predicated region
      $region41: #{run.7} parent=39 // pred_check
        %p975 = pneg %p172
      $region42: #{run.7} parent=39 // pred_check_branch
        %977 = sbr.rel (%p975) target = $region44
      $region43: #{run.7} parent=39 // pred_region
        %s978 = smul.u32 2, %s21
      $region44: #{run.7} parent=39 // pred_fallthru
        _
    $region40: #{run.7} parent=5 // pred_fallthru
      _
    %p979 = scmp.le.s32.totalorder 2, %s11
    // Predicated region
    $region45: #{run.7} parent=5 // pred_check
      %p980 = pneg %p979
    $region46: #{run.7} parent=5 // pred_check_branch
      %982 = sbr.rel (%p980) target = $region48
    $region47: #{run.7} parent=5 // pred_region
      %s983 = ssub.s32 %s11, 2
      // Predicated region
      $region49: #{run.7} parent=47 // pred_check
        %p984 = pneg %p178
      $region50: #{run.7} parent=47 // pred_check_branch
        %986 = sbr.rel (%p984) target = $region52
      $region51: #{run.7} parent=47 // pred_region
        %s987 = smul.u32 2, %s23
        %p988 = scmp.lt.s32.totalorder %s22, 1
        %s989 = scalar_select %p988, %s22, 1
        %p990 = scmp.lt.s32.totalorder %s987, 1
        %s991 = scalar_select %p990, %s987, 1
        %s992 = smul.addr %s989, 2
        %s993 = sadd.s32 %s991, %s992
        %s994 = smul.addr %s993, 8
        %s995 = scalar_lea.vmem %s5, %s994
      $region52: #{run.7} parent=47 // pred_fallthru
        _
    $region48: #{run.7} parent=5 // pred_fallthru
      _
  $region6: #{run.7} parent=0 // loop_footer
    %s15 = sadd.s32 1, %s11
  $region7: #{run.7} parent=0 // loop_footer_branch
    %10 = sbr.rel target = $region3
  $region8: #{run.7} parent=0 // loop_exit
    _

// kernel: run.5
$region0: #{run.5}
  #allocation0 [shape = 'u32[]', space=smem, size = 0x4, offset = 0x4, fixed_abs, tag = 'smem constant byte address 0x4 - core index']
  #allocation1 [shape = 'u32[144,128]{1,0:T(1,128)}', space=vmem, size = 0x12000, scoped, tag = 'internal scratch']
  %s0 = inlined_call_operand.vmem [shape: f32[32,32], index: 0, kind: input, shape index: {}]
  %s1 = inlined_call_operand.vmem [shape: f32[32,64], index: 1, kind: input, shape index: {}]
  %s2 = inlined_call_operand.vmem [shape: f32[1,64], index: 2, kind: input, shape index: {}]
  %s3 = inlined_call_operand.vmem [shape: f32[64,128], index: 3, kind: input, shape index: {}]
  %s4 = inlined_call_operand.vmem [shape: f32[1,128], index: 4, kind: input, shape index: {}]
  %s5 = inlined_call_operand.vmem [shape: f32[32,128], index: 5, kind: output, shape index: {}]
  %s6 = sld [smem:[#allocation0]]
  $region30: #{run.5} parent=0
    _
  %s8 = ssub.s32 1, %s6
  %s9 = scalar_select 0, %s8, %s6
  // Predicated region
  $region2: #{run.5} parent=0 // pred_check
    _
  $region3: #{run.5} parent=0 // pred_check_branch
    %11 = sbr.rel (0) target = $region5
  $region4: #{run.5} parent=0 // pred_region
    _
  $region5: #{run.5} parent=0 // pred_fallthru
    _
  // Predicated region
  $region6: #{run.5} parent=0 // pred_check
    _
  $region7: #{run.5} parent=0 // pred_check_branch
    %13 = sbr.rel (0) target = $region9
  $region8: #{run.5} parent=0 // pred_region
    _
  $region9: #{run.5} parent=0 // pred_fallthru
    _
  // Predicated region
  $region10: #{run.5} parent=0 // pred_check
    _
  $region11: #{run.5} parent=0 // pred_check_branch
    %15 = sbr.rel (0) target = $region13
  $region12: #{run.5} parent=0 // pred_region
    _
  $region13: #{run.5} parent=0 // pred_fallthru
    _
  // Predicated region
  $region14: #{run.5} parent=0 // pred_check
    _
  $region15: #{run.5} parent=0 // pred_check_branch
    %17 = sbr.rel (0) target = $region17
  $region16: #{run.5} parent=0 // pred_region
    _
  $region17: #{run.5} parent=0 // pred_fallthru
    _
  // Predicated region
  $region18: #{run.5} parent=0 // pred_check
    _
  $region19: #{run.5} parent=0 // pred_check_branch
    %19 = sbr.rel (0) target = $region21
  $region20: #{run.5} parent=0 // pred_region
    _
  $region21: #{run.5} parent=0 // pred_fallthru
    _
  %v20 = vld [vmem:[%s0] sm:$0xff]
  %v21 = vld [vmem:[%s0 + $0x8] sm:$0xff]
  %v22 = vld [vmem:[%s0 + $0x10] sm:$0xff]
  %v23 = vld [vmem:[%s0 + $0x18] sm:$0xff]
  %v24 = vld [vmem:[%s1] sm:$0xff]
  %v25 = vld [vmem:[%s1 + $0x8] sm:$0xff]
  %v26 = vld [vmem:[%s1 + $0x10] sm:$0xff]
  %v27 = vld [vmem:[%s1 + $0x18] sm:$0xff]
  %v28 = vld [vmem:[%s2] sm:$0x1]
  %v30 = vlaneseq
  %v31 = vshrl.u32 %v30, 7
  %v32 = vsub.s32 0, %v31
  %v33 = vrot.slane %v28, %v32
  %vm35 = vcmask 261120
  %v37 = vsel %vm35, %v20, 0
  %v40 = vsel %vm35, %v21, 0
  %v43 = vsel %vm35, %v22, 0
  %v46 = vsel %vm35, %v23, 0
  %48 = vmatprep.subr.mxu0 0.0
  %49 = vmatpush1.msra.mxu0 0.0
  %50 = vmatprep.subr.mxu0 0.0
  %51 = vmatpush1.msra.mxu0 0.0
  %52 = vmatprep.subr.mxu0 0.0
  %53 = vmatpush1.msra.mxu0 0.0
  %54 = vmatprep.subr.mxu0 0.0
  %55 = vmatpush1.msra.mxu0 0.0
  %56 = vmatprep.subr.mxu0 0.0
  %57 = vmatpush1.msra.mxu0 0.0
  %58 = vmatprep.subr.mxu0 0.0
  %59 = vmatpush1.msra.mxu0 0.0
  %60 = vmatprep.subr.mxu0 0.0
  %61 = vmatpush1.msra.mxu0 0.0
  %62 = vmatprep.subr.mxu0 0.0
  %63 = vmatpush1.msra.mxu0 0.0
  %64 = vmatprep.subr.mxu0 0.0
  %65 = vmatpush1.msra.mxu0 0.0
  %66 = vmatprep.subr.mxu0 0.0
  %67 = vmatpush1.msra.mxu0 0.0
  %68 = vmatprep.subr.mxu0 0.0
  %69 = vmatpush1.msra.mxu0 0.0
  %70 = vmatprep.subr.mxu0 0.0
  %71 = vmatpush1.msra.mxu0 0.0
  %72 = vmatprep.subr.mxu0 0.0
  %73 = vmatpush1.msra.mxu0 %v27
  %74 = vmatprep.subr.mxu0 0.0
  %75 = vmatpush1.msra.mxu0 %v26
  %76 = vmatprep.subr.mxu0 0.0
  %77 = vmatpush1.msra.mxu0 %v25
  %78 = vmatprep.subr.mxu0 0.0
  %79 = vmatpush1.msra.mxu0 %v24
  %80 = vmatprep.subr.mxu0 0.0
  %81 = vmatpush2.msra.mxu0 0.0
  %82 = vmatprep.subr.mxu0 0.0
  %83 = vmatpush2.msra.mxu0 0.0
  %84 = vmatprep.subr.mxu0 0.0
  %85 = vmatpush2.msra.mxu0 0.0
  %86 = vmatprep.subr.mxu0 0.0
  %87 = vmatpush2.msra.mxu0 0.0
  %88 = vmatprep.subr.mxu0 0.0
  %89 = vmatpush2.msra.mxu0 0.0
  %90 = vmatprep.subr.mxu0 0.0
  %91 = vmatpush2.msra.mxu0 0.0
  %92 = vmatprep.subr.mxu0 0.0
  %93 = vmatpush2.msra.mxu0 0.0
  %94 = vmatprep.subr.mxu0 0.0
  %95 = vmatpush2.msra.mxu0 0.0
  %96 = vmatprep.subr.mxu0 0.0
  %97 = vmatpush2.msra.mxu0 0.0
  %98 = vmatprep.subr.mxu0 0.0
  %99 = vmatpush2.msra.mxu0 0.0
  %100 = vmatprep.subr.mxu0 0.0
  %101 = vmatpush2.msra.mxu0 0.0
  %102 = vmatprep.subr.mxu0 0.0
  %103 = vmatpush2.msra.mxu0 0.0
  %104 = vmatprep.subr.mxu0 0.0
  %105 = vmatpush2.msra.mxu0 0.0
  %106 = vmatprep.subr.mxu0 0.0
  %107 = vmatpush2.msra.mxu0 0.0
  %108 = vmatprep.subr.mxu0 0.0
  %109 = vmatpush2.msra.mxu0 0.0
  %110 = vmatprep.subr.mxu0 0.0
  %111 = vmatpush2.msra.mxu0 0.0
  %112 = vmatprep.mubr.f32.mxu0 0.0
  %113 = vmatmul.mubr.f32.gmra.mxu0 %v37
  %v114 = vpop.f32.mrf.mxu0
  %v115 = vadd.f32 %v33, %v114
  %v116 = vpop.f32.mrf.mxu0
  %117 = vmatprep.mubr.f32.mxu0 0.0
  %118 = vmatmul.mubr.f32.gmra.mxu0 %v40
  %v119 = vpop.f32.mrf.mxu0
  %v120 = vadd.f32 %v33, %v119
  %v121 = vpop.f32.mrf.mxu0
  %122 = vmatprep.mubr.f32.mxu0 0.0
  %123 = vmatmul.mubr.f32.gmra.mxu0 %v43
  %v124 = vpop.f32.mrf.mxu0
  %v125 = vadd.f32 %v33, %v124
  %v126 = vpop.f32.mrf.mxu0
  %127 = vmatprep.mubr.f32.mxu0 0.0
  %128 = vmatmul.mubr.f32.gmra.mxu0 %v46
  %v129 = vpop.f32.mrf.mxu0
  %v130 = vadd.f32 %v33, %v129
  %v131 = vpop.f32.mrf.mxu0
  %132 = vdwg.mxu0
  %v133 = vmul.f32 %v115, %v115
  %v134 = vmul.f32 %v120, %v120
  %v135 = vmul.f32 %v125, %v125
  %v136 = vmul.f32 %v130, %v130
  %v137 = vmul.f32 %v115, %v133
  %v138 = vmul.f32 %v120, %v134
  %v139 = vmul.f32 %v125, %v135
  %v140 = vmul.f32 %v130, %v136
  %v141 = vmul.f32 %v137, 0.044715
  %v142 = vmul.f32 %v138, 0.044715
  %v143 = vmul.f32 %v139, 0.044715
  %v144 = vmul.f32 %v140, 0.044715
  %v145 = vadd.f32 %v115, %v141
  %v146 = vadd.f32 %v120, %v142
  %v147 = vadd.f32 %v125, %v143
  %v148 = vadd.f32 %v130, %v144
  %v149 = vmul.f32 %v145, 0.7978846
  %v150 = vmul.f32 %v146, 0.7978846
  %v151 = vmul.f32 %v147, 0.7978846
  %v152 = vmul.f32 %v148, 0.7978846
  %v153 = vtanh.pop %v149
  %v154 = vtanh.pop %v150
  %v155 = vtanh.pop %v151
  %v156 = vtanh.pop %v152
  %v157 = vadd.f32 %v153, 1.0
  %v158 = vadd.f32 %v154, 1.0
  %v159 = vadd.f32 %v155, 1.0
  %v160 = vadd.f32 %v156, 1.0
  %v161 = vmul.f32 %v157, 0.5
  %v162 = vmul.f32 %v158, 0.5
  %v163 = vmul.f32 %v159, 0.5
  %v164 = vmul.f32 %v160, 0.5
  %v165 = vmul.f32 %v115, %v161
  %v166 = vmul.f32 %v120, %v162
  %v167 = vmul.f32 %v125, %v163
  %v168 = vmul.f32 %v130, %v164
  %v169 = vld [vmem:[%s3] sm:$0xff]
  %v170 = vld [vmem:[%s3 + $0x8] sm:$0xff]
  %v171 = vld [vmem:[%s3 + $0x10] sm:$0xff]
  %v172 = vld [vmem:[%s3 + $0x18] sm:$0xff]
  %v173 = vld [vmem:[%s3 + $0x20] sm:$0xff]
  %v174 = vld [vmem:[%s3 + $0x28] sm:$0xff]
  %v175 = vld [vmem:[%s3 + $0x30] sm:$0xff]
  %v176 = vld [vmem:[%s3 + $0x38] sm:$0xff]
  %v177 = vld [vmem:[%s4] sm:$0x1]
  %v179 = vlaneseq
  %v180 = vshrl.u32 %v179, 7
  %v181 = vsub.s32 0, %v180
  %v182 = vrot.slane %v177, %v181
  %vm184 = vcmask 523264
  %v186 = vsel %vm184, %v165, 0
  %v189 = vsel %vm184, %v166, 0
  %v192 = vsel %vm184, %v167, 0
  %v195 = vsel %vm184, %v168, 0
  %197 = vmatprep.subr.mxu0 0.0
  %198 = vmatpush1.msra.mxu0 0.0
  %199 = vmatprep.subr.mxu0 0.0
  %200 = vmatpush1.msra.mxu0 0.0
  %201 = vmatprep.subr.mxu0 0.0
  %202 = vmatpush1.msra.mxu0 0.0
  %203 = vmatprep.subr.mxu0 0.0
  %204 = vmatpush1.msra.mxu0 0.0
  %205 = vmatprep.subr.mxu0 0.0
  %206 = vmatpush1.msra.mxu0 0.0
  %207 = vmatprep.subr.mxu0 0.0
  %208 = vmatpush1.msra.mxu0 0.0
  %209 = vmatprep.subr.mxu0 0.0
  %210 = vmatpush1.msra.mxu0 0.0
  %211 = vmatprep.subr.mxu0 0.0
  %212 = vmatpush1.msra.mxu0 0.0
  %213 = vmatprep.subr.mxu0 0.0
  %214 = vmatpush1.msra.mxu0 %v176
  %215 = vmatprep.subr.mxu0 0.0
  %216 = vmatpush1.msra.mxu0 %v175
  %217 = vmatprep.subr.mxu0 0.0
  %218 = vmatpush1.msra.mxu0 %v174
  %219 = vmatprep.subr.mxu0 0.0
  %220 = vmatpush1.msra.mxu0 %v173
  %221 = vmatprep.subr.mxu0 0.0
  %222 = vmatpush1.msra.mxu0 %v172
  %223 = vmatprep.subr.mxu0 0.0
  %224 = vmatpush1.msra.mxu0 %v171
  %225 = vmatprep.subr.mxu0 0.0
  %226 = vmatpush1.msra.mxu0 %v170
  %227 = vmatprep.subr.mxu0 0.0
  %228 = vmatpush1.msra.mxu0 %v169
  %229 = vmatprep.subr.mxu0 0.0
  %230 = vmatpush2.msra.mxu0 0.0
  %231 = vmatprep.subr.mxu0 0.0
  %232 = vmatpush2.msra.mxu0 0.0
  %233 = vmatprep.subr.mxu0 0.0
  %234 = vmatpush2.msra.mxu0 0.0
  %235 = vmatprep.subr.mxu0 0.0
  %236 = vmatpush2.msra.mxu0 0.0
  %237 = vmatprep.subr.mxu0 0.0
  %238 = vmatpush2.msra.mxu0 0.0
  %239 = vmatprep.subr.mxu0 0.0
  %240 = vmatpush2.msra.mxu0 0.0
  %241 = vmatprep.subr.mxu0 0.0
  %242 = vmatpush2.msra.mxu0 0.0
  %243 = vmatprep.subr.mxu0 0.0
  %244 = vmatpush2.msra.mxu0 0.0
  %245 = vmatprep.subr.mxu0 0.0
  %246 = vmatpush2.msra.mxu0 0.0
  %247 = vmatprep.subr.mxu0 0.0
  %248 = vmatpush2.msra.mxu0 0.0
  %249 = vmatprep.subr.mxu0 0.0
  %250 = vmatpush2.msra.mxu0 0.0
  %251 = vmatprep.subr.mxu0 0.0
  %252 = vmatpush2.msra.mxu0 0.0
  %253 = vmatprep.subr.mxu0 0.0
  %254 = vmatpush2.msra.mxu0 0.0
  %255 = vmatprep.subr.mxu0 0.0
  %256 = vmatpush2.msra.mxu0 0.0
  %257 = vmatprep.subr.mxu0 0.0
  %258 = vmatpush2.msra.mxu0 0.0
  %259 = vmatprep.subr.mxu0 0.0
  %260 = vmatpush2.msra.mxu0 0.0
  %261 = vmatprep.mubr.f32.mxu0 0.0
  %262 = vmatmul.mubr.f32.gmra.mxu0 %v186
  %v263 = vpop.f32.mrf.mxu0
  %v264 = vadd.f32 %v182, %v263
  %v265 = vpop.f32.mrf.mxu0
  %266 = vmatprep.mubr.f32.mxu0 0.0
  %267 = vmatmul.mubr.f32.gmra.mxu0 %v189
  %v268 = vpop.f32.mrf.mxu0
  %v269 = vadd.f32 %v182, %v268
  %v270 = vpop.f32.mrf.mxu0
  %271 = vmatprep.mubr.f32.mxu0 0.0
  %272 = vmatmul.mubr.f32.gmra.mxu0 %v192
  %v273 = vpop.f32.mrf.mxu0
  %v274 = vadd.f32 %v182, %v273
  %v275 = vpop.f32.mrf.mxu0
  %276 = vmatprep.mubr.f32.mxu0 0.0
  %277 = vmatmul.mubr.f32.gmra.mxu0 %v195
  %v278 = vpop.f32.mrf.mxu0
  %v279 = vadd.f32 %v182, %v278
  %v280 = vpop.f32.mrf.mxu0
  %281 = vdwg.mxu0
  %282 = vst [vmem:[%s5] sm:$0xff] %v264
  %283 = vst [vmem:[%s5 + $0x8] sm:$0xff] %v269
  %284 = vst [vmem:[%s5 + $0x10] sm:$0xff] %v274
  %285 = vst [vmem:[%s5 + $0x18] sm:$0xff] %v279
  // Predicated region
  $region22: #{run.5} parent=0 // pred_check
    _
  $region23: #{run.5} parent=0 // pred_check_branch
    %287 = sbr.rel (0) target = $region25
  $region24: #{run.5} parent=0 // pred_region
    _
  $region25: #{run.5} parent=0 // pred_fallthru
    _
  // Predicated region
  $region26: #{run.5} parent=0 // pred_check
    _
  $region27: #{run.5} parent=0 // pred_check_branch
    %289 = sbr.rel (0) target = $region29
  $region28: #{run.5} parent=0 // pred_region
    _
  $region29: #{run.5} parent=0 // pred_fallthru
    _

</llo_original>
